<compile_context>
chip_gen: v6e
topology: v6e:2x2x1
jax: 0.10.0
libtpu: 0.0.40
codegen_flags: <defaults>
</compile_context>

<pallas_src>
import functools

import jax
import jax.numpy as jnp
import numpy as np
from jax.experimental import pallas as pl
from jax.experimental.pallas import tpu as pltpu  # noqa: F401  (kept for parity / future tiling)


def lstm_forecast_kernel(xcat_ref, wemb_ref, pos_ref,
                         wih_ref, whh_ref, blstm_ref,
                         w1_ref, b1_ref, w2_ref, b2_ref,
                         out_ref, *, seq_len):
    T = seq_len
    B = out_ref.shape[0]
    D = wih_ref.shape[0]

    # ---------------- fused embedding (one matmul) ----------------
    # xcat: (T*B, 3C+M) = [x[t-1], x[t], x[t+1], marks]  (circular taps built in wrapper)
    emb = (jnp.dot(xcat_ref[...], wemb_ref[...],
                   preferred_element_type=jnp.float32)
           + pos_ref[...])                                            # (T*B, D)

    # ------- hoisted input-to-gate projection (one big matmul + bias) -------
    gates_x = (jnp.dot(emb, wih_ref[...],
                       preferred_element_type=jnp.float32)
               + blstm_ref[...])                                      # (T*B, 4D)

    whh = whh_ref[...]                                                # (D, 4D)
    h = jnp.zeros((B, D), jnp.float32)
    c = jnp.zeros((B, D), jnp.float32)

    # ---------------- LSTM recurrence ----------------
    # Fully unrolled (T is small & static); h/c live in vregs, only the
    # recurrent matmul h @ whh remains on the serial critical path.
    for t in range(T):
        gates = (gates_x[t * B:(t + 1) * B, :]
                 + jnp.dot(h, whh, preferred_element_type=jnp.float32))  # (B, 4D)
        sig = jax.nn.sigmoid(gates)      # full-width EUP op (one vreg wide)
        tnh = jnp.tanh(gates)
        i = sig[:, 0:D]
        f = sig[:, D:2 * D]
        g = tnh[:, 2 * D:3 * D]
        o = sig[:, 3 * D:4 * D]
        c = f * c + i * g
        h = o * jnp.tanh(c)

    # ------------- projection head (last hidden state), lane-dense out -------------
    z = jnp.tanh(jnp.dot(h, w1_ref[...],
                         preferred_element_type=jnp.float32) + b1_ref[...])
    out_ref[...] = (jnp.dot(z, w2_ref[...],
                            preferred_element_type=jnp.float32) + b2_ref[...])


def model_forward(x_enc, x_mark_enc, params, pred_len, enc_in):
    B, T, C = x_enc.shape
    out_dim = enc_in * pred_len
    out_pad = params["w2_pad"].shape[1]

    # time-major + circular conv taps + mark concat (cheap XLA, keeps relayout
    # work out of the kernel)
    x_t = jnp.transpose(x_enc, (1, 0, 2))          # (T, B, C)
    m_t = jnp.transpose(x_mark_enc, (1, 0, 2))     # (T, B, M)
    x_prev = jnp.roll(x_t, 1, axis=0)              # x[t-1 mod T]
    x_next = jnp.roll(x_t, -1, axis=0)             # x[t+1 mod T]
    x_cat = jnp.concatenate([x_prev, x_t, x_next, m_t],
                            axis=-1).reshape(T * B, -1)   # (T*B, 3C+M)
    pos_tb = jnp.repeat(params["pos"], B, axis=0)         # (T*B, D), row = t*B + b

    kernel = functools.partial(lstm_forecast_kernel, seq_len=T)
    out = pl.pallas_call(
        kernel,
        out_shape=jax.ShapeDtypeStruct((B, out_pad), jnp.float32),
    )(x_cat, params["wemb"], pos_tb,
      params["wih_t"], params["whh_t"], params["blstm"],
      params["w1_t"], params["b1"], params["w2_pad"], params["b2_pad"])

    # slice off lane padding, then reshape exactly like .view(B, pred_len, enc_in)
    return out[:, :out_dim].reshape(B, pred_len, enc_in)


def make_positional_embedding(T, D):
    position = jnp.arange(T, dtype=jnp.float32)[:, None]
    div_term = jnp.exp(jnp.arange(0, D, 2, dtype=jnp.float32)
                       * (-jnp.log(10000.0) / D))
    pe = jnp.zeros((T, D), dtype=jnp.float32)
    pe = pe.at[:, 0::2].set(jnp.sin(position * div_term))
    pe = pe.at[:, 1::2].set(jnp.cos(position * div_term))
    return pe


def reference_forward(x_enc, x_mark, pe, w_conv, w_mark,
                      w_ih, w_hh, b_ih, b_hh, w1, b1, w2, b2, pred_len):
    """Pure-JAX reference mirroring PyTorch semantics."""
    B, T, C = x_enc.shape
    D = pe.shape[1]
    xp = jnp.concatenate([x_enc[:, -1:, :], x_enc, x_enc[:, :1, :]], axis=1)
    val = jnp.zeros((B, T, D), jnp.float32)
    for k in range(3):
        val = val + jnp.einsum("btc,dc->btd", xp[:, k:k + T, :], w_conv[:, :, k])
    temp = jnp.einsum("btm,dm->btd", x_mark, w_mark)
    emb = val + temp + pe[None]
    h = jnp.zeros((B, D), jnp.float32)
    c = jnp.zeros((B, D), jnp.float32)
    for t in range(T):
        gates = emb[:, t, :] @ w_ih.T + h @ w_hh.T + b_ih + b_hh
        i = jax.nn.sigmoid(gates[:, :D])
        f = jax.nn.sigmoid(gates[:, D:2 * D])
        g = jnp.tanh(gates[:, 2 * D:3 * D])
        o = jax.nn.sigmoid(gates[:, 3 * D:])
        c = f * c + i * g
        h = o * jnp.tanh(c)
    z = jnp.tanh(h @ w1.T + b1)
    out = z @ w2.T + b2
    return out.reshape(B, pred_len, C)


if __name__ == "__main__":
    # configs: seq_len=8, pred_len=8, enc_in=4, d_model=32, e_layers=1,
    #          embed='timeF', freq='h' (-> 4 time-mark features)
    B, T, C, D, P, M = 2, 8, 4, 32, 8, 4

    key = jax.random.PRNGKey(0)
    ks = jax.random.split(key, 14)
    s = 0.1

    # deterministic synthetic parameters (PyTorch-layout), then repacked for kernel
    w_conv = jax.random.normal(ks[0], (D, C, 3), jnp.float32) * s   # Conv1d weight
    w_mark = jax.random.normal(ks[1], (D, M), jnp.float32) * s      # timeF Linear
    w_ih = jax.random.normal(ks[2], (4 * D, D), jnp.float32) * s    # LSTM weight_ih
    w_hh = jax.random.normal(ks[3], (4 * D, D), jnp.float32) * s    # LSTM weight_hh
    b_ih = jax.random.normal(ks[4], (4 * D,), jnp.float32) * s
    b_hh = jax.random.normal(ks[5], (4 * D,), jnp.float32) * s
    w1 = jax.random.normal(ks[6], (D, D), jnp.float32) * s          # proj Linear 1
    b1 = jax.random.normal(ks[7], (D,), jnp.float32) * s
    w2 = jax.random.normal(ks[8], (C * P, D), jnp.float32) * s      # proj Linear 2
    b2 = jax.random.normal(ks[9], (C * P,), jnp.float32) * s
    pe = make_positional_embedding(T, D)

    # fused embedding weight: rows = [conv tap k=0 (x[t-1]); k=1 (x[t]); k=2 (x[t+1]); marks]
    wemb = jnp.concatenate([w_conv[:, :, 0].T,
                            w_conv[:, :, 1].T,
                            w_conv[:, :, 2].T,
                            w_mark.T], axis=0)                       # (3C+M, D)

    # lane-dense (128-wide) projection output
    out_dim = C * P
    out_pad = ((out_dim + 127) // 128) * 128
    w2_pad = jnp.zeros((D, out_pad), jnp.float32).at[:, :out_dim].set(w2.T)
    b2_pad = jnp.zeros((1, out_pad), jnp.float32).at[:, :out_dim].set(b2)

    params = {
        "pos": pe,                                   # (T, D)
        "wemb": wemb,                                # (3C+M, D)
        "wih_t": w_ih.T,                             # (D, 4D)
        "whh_t": w_hh.T,                             # (D, 4D)
        "blstm": (b_ih + b_hh)[None, :],             # (1, 4D)
        "w1_t": w1.T,                                # (D, D)
        "b1": b1[None, :],                           # (1, D)
        "w2_pad": w2_pad,                            # (D, 128)
        "b2_pad": b2_pad,                            # (1, 128)
    }

    # inputs (x_dec / x_mark_dec are unused by the forward pass; mask=None)
    x_enc = jax.random.normal(ks[10], (B, T, C), jnp.float32)
    x_mark_enc = jax.random.normal(ks[11], (B, T, M), jnp.float32)

    out = model_forward(x_enc, x_mark_enc, params, P, C)
    out = jax.block_until_ready(out)
    assert out.shape == (B, P, C), out.shape

    ref = reference_forward(x_enc, x_mark_enc, pe, w_conv, w_mark,
                            w_ih, w_hh, b_ih, b_hh, w1, b1, w2, b2, P)
    np.testing.assert_allclose(np.asarray(out), np.asarray(ref),
                               rtol=2e-2, atol=2e-2)

    print("KERNEL_OK")
</pallas_src>

<mosaic_0001>
module attributes {stable_mosaic.version = 11 : i64} {
  func.func @lstm_forecast_kernel(%arg0: memref<16x16xf32, #tpu.memory_space<vmem>>, %arg1: memref<16x32xf32, #tpu.memory_space<vmem>>, %arg2: memref<16x32xf32, #tpu.memory_space<vmem>>, %arg3: memref<32x128xf32, #tpu.memory_space<vmem>>, %arg4: memref<32x128xf32, #tpu.memory_space<vmem>>, %arg5: memref<1x128xf32, #tpu.memory_space<vmem>>, %arg6: memref<32x32xf32, #tpu.memory_space<vmem>>, %arg7: memref<1x32xf32, #tpu.memory_space<vmem>>, %arg8: memref<32x128xf32, #tpu.memory_space<vmem>>, %arg9: memref<1x128xf32, #tpu.memory_space<vmem>>, %arg10: memref<2x128xf32, #tpu.memory_space<vmem>>) attributes {dimension_semantics = [], scalar_prefetch = 0 : i64, scratch_operands = 0 : i64, tpu.core_type = #tpu.core_type<tc>} {
    %c0 = arith.constant 0 : index
    %c0_0 = arith.constant 0 : index
    %0 = vector.load %arg0[%c0, %c0_0] : memref<16x16xf32, #tpu.memory_space<vmem>>, vector<16x16xf32>
    %c0_1 = arith.constant 0 : index
    %c0_2 = arith.constant 0 : index
    %1 = vector.load %arg1[%c0_1, %c0_2] : memref<16x32xf32, #tpu.memory_space<vmem>>, vector<16x32xf32>
    %cst = arith.constant dense<0.000000e+00> : vector<16x32xf32>
    %2 = tpu.matmul %0, %1, %cst {dimension_numbers = #tpu.dot_dimension_numbers<[1], [0], [0], [1], [0, 0, 1, 1], [], []>} : vector<16x16xf32>, vector<16x32xf32>, vector<16x32xf32> -> vector<16x32xf32>
    %c0_3 = arith.constant 0 : index
    %c0_4 = arith.constant 0 : index
    %3 = vector.load %arg2[%c0_3, %c0_4] : memref<16x32xf32, #tpu.memory_space<vmem>>, vector<16x32xf32>
    %4 = arith.addf %2, %3 : vector<16x32xf32>
    %c0_5 = arith.constant 0 : index
    %c0_6 = arith.constant 0 : index
    %5 = vector.load %arg3[%c0_5, %c0_6] : memref<32x128xf32, #tpu.memory_space<vmem>>, vector<32x128xf32>
    %cst_7 = arith.constant dense<0.000000e+00> : vector<16x128xf32>
    %6 = tpu.matmul %4, %5, %cst_7 {dimension_numbers = #tpu.dot_dimension_numbers<[1], [0], [0], [1], [0, 0, 1, 1], [], []>} : vector<16x32xf32>, vector<32x128xf32>, vector<16x128xf32> -> vector<16x128xf32>
    %c0_8 = arith.constant 0 : index
    %c0_9 = arith.constant 0 : index
    %7 = vector.load %arg5[%c0_8, %c0_9] : memref<1x128xf32, #tpu.memory_space<vmem>>, vector<1x128xf32>
    %8 = vector.broadcast %7 : vector<1x128xf32> to vector<16x128xf32>
    %9 = arith.addf %6, %8 : vector<16x128xf32>
    %c0_10 = arith.constant 0 : index
    %c0_11 = arith.constant 0 : index
    %10 = vector.load %arg4[%c0_10, %c0_11] : memref<32x128xf32, #tpu.memory_space<vmem>>, vector<32x128xf32>
    %cst_12 = arith.constant 0.000000e+00 : f32
    %11 = vector.broadcast %cst_12 : f32 to vector<2x32xf32>
    %cst_13 = arith.constant 0.000000e+00 : f32
    %12 = vector.broadcast %cst_13 : f32 to vector<2x32xf32>
    %13 = vector.extract_strided_slice %9 {offsets = [0, 0], sizes = [2, 128], strides = [1, 1]} : vector<16x128xf32> to vector<2x128xf32>
    %cst_14 = arith.constant dense<0.000000e+00> : vector<2x128xf32>
    %14 = tpu.matmul %11, %10, %cst_14 {dimension_numbers = #tpu.dot_dimension_numbers<[1], [0], [0], [1], [0, 0, 1, 1], [], []>} : vector<2x32xf32>, vector<32x128xf32>, vector<2x128xf32> -> vector<2x128xf32>
    %15 = arith.addf %13, %14 : vector<2x128xf32>
    %16 = arith.negf %15 : vector<2x128xf32>
    %17 = math.exp %16 : vector<2x128xf32>
    %cst_15 = arith.constant 1.000000e+00 : f32
    %18 = vector.broadcast %cst_15 : f32 to vector<2x128xf32>
    %19 = arith.addf %18, %17 : vector<2x128xf32>
    %20 = arith.divf %18, %19 : vector<2x128xf32>
    %21 = math.tanh %15 : vector<2x128xf32>
    %22 = vector.extract_strided_slice %20 {offsets = [0, 0], sizes = [2, 32], strides = [1, 1]} : vector<2x128xf32> to vector<2x32xf32>
    %23 = vector.extract_strided_slice %20 {offsets = [0, 32], sizes = [2, 32], strides = [1, 1]} : vector<2x128xf32> to vector<2x32xf32>
    %24 = vector.extract_strided_slice %21 {offsets = [0, 64], sizes = [2, 32], strides = [1, 1]} : vector<2x128xf32> to vector<2x32xf32>
    %25 = vector.extract_strided_slice %20 {offsets = [0, 96], sizes = [2, 32], strides = [1, 1]} : vector<2x128xf32> to vector<2x32xf32>
    %26 = arith.mulf %23, %12 : vector<2x32xf32>
    %27 = arith.mulf %22, %24 : vector<2x32xf32>
    %28 = arith.addf %26, %27 : vector<2x32xf32>
    %29 = math.tanh %28 : vector<2x32xf32>
    %30 = arith.mulf %25, %29 : vector<2x32xf32>
    %31 = vector.extract_strided_slice %9 {offsets = [2, 0], sizes = [2, 128], strides = [1, 1]} : vector<16x128xf32> to vector<2x128xf32>
    %cst_16 = arith.constant dense<0.000000e+00> : vector<2x128xf32>
    %32 = tpu.matmul %30, %10, %cst_16 {dimension_numbers = #tpu.dot_dimension_numbers<[1], [0], [0], [1], [0, 0, 1, 1], [], []>} : vector<2x32xf32>, vector<32x128xf32>, vector<2x128xf32> -> vector<2x128xf32>
    %33 = arith.addf %31, %32 : vector<2x128xf32>
    %34 = arith.negf %33 : vector<2x128xf32>
    %35 = math.exp %34 : vector<2x128xf32>
    %cst_17 = arith.constant 1.000000e+00 : f32
    %36 = vector.broadcast %cst_17 : f32 to vector<2x128xf32>
    %37 = arith.addf %36, %35 : vector<2x128xf32>
    %38 = arith.divf %36, %37 : vector<2x128xf32>
    %39 = math.tanh %33 : vector<2x128xf32>
    %40 = vector.extract_strided_slice %38 {offsets = [0, 0], sizes = [2, 32], strides = [1, 1]} : vector<2x128xf32> to vector<2x32xf32>
    %41 = vector.extract_strided_slice %38 {offsets = [0, 32], sizes = [2, 32], strides = [1, 1]} : vector<2x128xf32> to vector<2x32xf32>
    %42 = vector.extract_strided_slice %39 {offsets = [0, 64], sizes = [2, 32], strides = [1, 1]} : vector<2x128xf32> to vector<2x32xf32>
    %43 = vector.extract_strided_slice %38 {offsets = [0, 96], sizes = [2, 32], strides = [1, 1]} : vector<2x128xf32> to vector<2x32xf32>
    %44 = arith.mulf %41, %28 : vector<2x32xf32>
    %45 = arith.mulf %40, %42 : vector<2x32xf32>
    %46 = arith.addf %44, %45 : vector<2x32xf32>
    %47 = math.tanh %46 : vector<2x32xf32>
    %48 = arith.mulf %43, %47 : vector<2x32xf32>
    %49 = vector.extract_strided_slice %9 {offsets = [4, 0], sizes = [2, 128], strides = [1, 1]} : vector<16x128xf32> to vector<2x128xf32>
    %cst_18 = arith.constant dense<0.000000e+00> : vector<2x128xf32>
    %50 = tpu.matmul %48, %10, %cst_18 {dimension_numbers = #tpu.dot_dimension_numbers<[1], [0], [0], [1], [0, 0, 1, 1], [], []>} : vector<2x32xf32>, vector<32x128xf32>, vector<2x128xf32> -> vector<2x128xf32>
    %51 = arith.addf %49, %50 : vector<2x128xf32>
    %52 = arith.negf %51 : vector<2x128xf32>
    %53 = math.exp %52 : vector<2x128xf32>
    %cst_19 = arith.constant 1.000000e+00 : f32
    %54 = vector.broadcast %cst_19 : f32 to vector<2x128xf32>
    %55 = arith.addf %54, %53 : vector<2x128xf32>
    %56 = arith.divf %54, %55 : vector<2x128xf32>
    %57 = math.tanh %51 : vector<2x128xf32>
    %58 = vector.extract_strided_slice %56 {offsets = [0, 0], sizes = [2, 32], strides = [1, 1]} : vector<2x128xf32> to vector<2x32xf32>
    %59 = vector.extract_strided_slice %56 {offsets = [0, 32], sizes = [2, 32], strides = [1, 1]} : vector<2x128xf32> to vector<2x32xf32>
    %60 = vector.extract_strided_slice %57 {offsets = [0, 64], sizes = [2, 32], strides = [1, 1]} : vector<2x128xf32> to vector<2x32xf32>
    %61 = vector.extract_strided_slice %56 {offsets = [0, 96], sizes = [2, 32], strides = [1, 1]} : vector<2x128xf32> to vector<2x32xf32>
    %62 = arith.mulf %59, %46 : vector<2x32xf32>
    %63 = arith.mulf %58, %60 : vector<2x32xf32>
    %64 = arith.addf %62, %63 : vector<2x32xf32>
    %65 = math.tanh %64 : vector<2x32xf32>
    %66 = arith.mulf %61, %65 : vector<2x32xf32>
    %67 = vector.extract_strided_slice %9 {offsets = [6, 0], sizes = [2, 128], strides = [1, 1]} : vector<16x128xf32> to vector<2x128xf32>
    %cst_20 = arith.constant dense<0.000000e+00> : vector<2x128xf32>
    %68 = tpu.matmul %66, %10, %cst_20 {dimension_numbers = #tpu.dot_dimension_numbers<[1], [0], [0], [1], [0, 0, 1, 1], [], []>} : vector<2x32xf32>, vector<32x128xf32>, vector<2x128xf32> -> vector<2x128xf32>
    %69 = arith.addf %67, %68 : vector<2x128xf32>
    %70 = arith.negf %69 : vector<2x128xf32>
    %71 = math.exp %70 : vector<2x128xf32>
    %cst_21 = arith.constant 1.000000e+00 : f32
    %72 = vector.broadcast %cst_21 : f32 to vector<2x128xf32>
    %73 = arith.addf %72, %71 : vector<2x128xf32>
    %74 = arith.divf %72, %73 : vector<2x128xf32>
    %75 = math.tanh %69 : vector<2x128xf32>
    %76 = vector.extract_strided_slice %74 {offsets = [0, 0], sizes = [2, 32], strides = [1, 1]} : vector<2x128xf32> to vector<2x32xf32>
    %77 = vector.extract_strided_slice %74 {offsets = [0, 32], sizes = [2, 32], strides = [1, 1]} : vector<2x128xf32> to vector<2x32xf32>
    %78 = vector.extract_strided_slice %75 {offsets = [0, 64], sizes = [2, 32], strides = [1, 1]} : vector<2x128xf32> to vector<2x32xf32>
    %79 = vector.extract_strided_slice %74 {offsets = [0, 96], sizes = [2, 32], strides = [1, 1]} : vector<2x128xf32> to vector<2x32xf32>
    %80 = arith.mulf %77, %64 : vector<2x32xf32>
    %81 = arith.mulf %76, %78 : vector<2x32xf32>
    %82 = arith.addf %80, %81 : vector<2x32xf32>
    %83 = math.tanh %82 : vector<2x32xf32>
    %84 = arith.mulf %79, %83 : vector<2x32xf32>
    %85 = vector.extract_strided_slice %9 {offsets = [8, 0], sizes = [2, 128], strides = [1, 1]} : vector<16x128xf32> to vector<2x128xf32>
    %cst_22 = arith.constant dense<0.000000e+00> : vector<2x128xf32>
    %86 = tpu.matmul %84, %10, %cst_22 {dimension_numbers = #tpu.dot_dimension_numbers<[1], [0], [0], [1], [0, 0, 1, 1], [], []>} : vector<2x32xf32>, vector<32x128xf32>, vector<2x128xf32> -> vector<2x128xf32>
    %87 = arith.addf %85, %86 : vector<2x128xf32>
    %88 = arith.negf %87 : vector<2x128xf32>
    %89 = math.exp %88 : vector<2x128xf32>
    %cst_23 = arith.constant 1.000000e+00 : f32
    %90 = vector.broadcast %cst_23 : f32 to vector<2x128xf32>
    %91 = arith.addf %90, %89 : vector<2x128xf32>
    %92 = arith.divf %90, %91 : vector<2x128xf32>
    %93 = math.tanh %87 : vector<2x128xf32>
    %94 = vector.extract_strided_slice %92 {offsets = [0, 0], sizes = [2, 32], strides = [1, 1]} : vector<2x128xf32> to vector<2x32xf32>
    %95 = vector.extract_strided_slice %92 {offsets = [0, 32], sizes = [2, 32], strides = [1, 1]} : vector<2x128xf32> to vector<2x32xf32>
    %96 = vector.extract_strided_slice %93 {offsets = [0, 64], sizes = [2, 32], strides = [1, 1]} : vector<2x128xf32> to vector<2x32xf32>
    %97 = vector.extract_strided_slice %92 {offsets = [0, 96], sizes = [2, 32], strides = [1, 1]} : vector<2x128xf32> to vector<2x32xf32>
    %98 = arith.mulf %95, %82 : vector<2x32xf32>
    %99 = arith.mulf %94, %96 : vector<2x32xf32>
    %100 = arith.addf %98, %99 : vector<2x32xf32>
    %101 = math.tanh %100 : vector<2x32xf32>
    %102 = arith.mulf %97, %101 : vector<2x32xf32>
    %103 = vector.extract_strided_slice %9 {offsets = [10, 0], sizes = [2, 128], strides = [1, 1]} : vector<16x128xf32> to vector<2x128xf32>
    %cst_24 = arith.constant dense<0.000000e+00> : vector<2x128xf32>
    %104 = tpu.matmul %102, %10, %cst_24 {dimension_numbers = #tpu.dot_dimension_numbers<[1], [0], [0], [1], [0, 0, 1, 1], [], []>} : vector<2x32xf32>, vector<32x128xf32>, vector<2x128xf32> -> vector<2x128xf32>
    %105 = arith.addf %103, %104 : vector<2x128xf32>
    %106 = arith.negf %105 : vector<2x128xf32>
    %107 = math.exp %106 : vector<2x128xf32>
    %cst_25 = arith.constant 1.000000e+00 : f32
    %108 = vector.broadcast %cst_25 : f32 to vector<2x128xf32>
    %109 = arith.addf %108, %107 : vector<2x128xf32>
    %110 = arith.divf %108, %109 : vector<2x128xf32>
    %111 = math.tanh %105 : vector<2x128xf32>
    %112 = vector.extract_strided_slice %110 {offsets = [0, 0], sizes = [2, 32], strides = [1, 1]} : vector<2x128xf32> to vector<2x32xf32>
    %113 = vector.extract_strided_slice %110 {offsets = [0, 32], sizes = [2, 32], strides = [1, 1]} : vector<2x128xf32> to vector<2x32xf32>
    %114 = vector.extract_strided_slice %111 {offsets = [0, 64], sizes = [2, 32], strides = [1, 1]} : vector<2x128xf32> to vector<2x32xf32>
    %115 = vector.extract_strided_slice %110 {offsets = [0, 96], sizes = [2, 32], strides = [1, 1]} : vector<2x128xf32> to vector<2x32xf32>
    %116 = arith.mulf %113, %100 : vector<2x32xf32>
    %117 = arith.mulf %112, %114 : vector<2x32xf32>
    %118 = arith.addf %116, %117 : vector<2x32xf32>
    %119 = math.tanh %118 : vector<2x32xf32>
    %120 = arith.mulf %115, %119 : vector<2x32xf32>
    %121 = vector.extract_strided_slice %9 {offsets = [12, 0], sizes = [2, 128], strides = [1, 1]} : vector<16x128xf32> to vector<2x128xf32>
    %cst_26 = arith.constant dense<0.000000e+00> : vector<2x128xf32>
    %122 = tpu.matmul %120, %10, %cst_26 {dimension_numbers = #tpu.dot_dimension_numbers<[1], [0], [0], [1], [0, 0, 1, 1], [], []>} : vector<2x32xf32>, vector<32x128xf32>, vector<2x128xf32> -> vector<2x128xf32>
    %123 = arith.addf %121, %122 : vector<2x128xf32>
    %124 = arith.negf %123 : vector<2x128xf32>
    %125 = math.exp %124 : vector<2x128xf32>
    %cst_27 = arith.constant 1.000000e+00 : f32
    %126 = vector.broadcast %cst_27 : f32 to vector<2x128xf32>
    %127 = arith.addf %126, %125 : vector<2x128xf32>
    %128 = arith.divf %126, %127 : vector<2x128xf32>
    %129 = math.tanh %123 : vector<2x128xf32>
    %130 = vector.extract_strided_slice %128 {offsets = [0, 0], sizes = [2, 32], strides = [1, 1]} : vector<2x128xf32> to vector<2x32xf32>
    %131 = vector.extract_strided_slice %128 {offsets = [0, 32], sizes = [2, 32], strides = [1, 1]} : vector<2x128xf32> to vector<2x32xf32>
    %132 = vector.extract_strided_slice %129 {offsets = [0, 64], sizes = [2, 32], strides = [1, 1]} : vector<2x128xf32> to vector<2x32xf32>
    %133 = vector.extract_strided_slice %128 {offsets = [0, 96], sizes = [2, 32], strides = [1, 1]} : vector<2x128xf32> to vector<2x32xf32>
    %134 = arith.mulf %131, %118 : vector<2x32xf32>
    %135 = arith.mulf %130, %132 : vector<2x32xf32>
    %136 = arith.addf %134, %135 : vector<2x32xf32>
    %137 = math.tanh %136 : vector<2x32xf32>
    %138 = arith.mulf %133, %137 : vector<2x32xf32>
    %139 = vector.extract_strided_slice %9 {offsets = [14, 0], sizes = [2, 128], strides = [1, 1]} : vector<16x128xf32> to vector<2x128xf32>
    %cst_28 = arith.constant dense<0.000000e+00> : vector<2x128xf32>
    %140 = tpu.matmul %138, %10, %cst_28 {dimension_numbers = #tpu.dot_dimension_numbers<[1], [0], [0], [1], [0, 0, 1, 1], [], []>} : vector<2x32xf32>, vector<32x128xf32>, vector<2x128xf32> -> vector<2x128xf32>
    %141 = arith.addf %139, %140 : vector<2x128xf32>
    %142 = arith.negf %141 : vector<2x128xf32>
    %143 = math.exp %142 : vector<2x128xf32>
    %cst_29 = arith.constant 1.000000e+00 : f32
    %144 = vector.broadcast %cst_29 : f32 to vector<2x128xf32>
    %145 = arith.addf %144, %143 : vector<2x128xf32>
    %146 = arith.divf %144, %145 : vector<2x128xf32>
    %147 = math.tanh %141 : vector<2x128xf32>
    %148 = vector.extract_strided_slice %146 {offsets = [0, 0], sizes = [2, 32], strides = [1, 1]} : vector<2x128xf32> to vector<2x32xf32>
    %149 = vector.extract_strided_slice %146 {offsets = [0, 32], sizes = [2, 32], strides = [1, 1]} : vector<2x128xf32> to vector<2x32xf32>
    %150 = vector.extract_strided_slice %147 {offsets = [0, 64], sizes = [2, 32], strides = [1, 1]} : vector<2x128xf32> to vector<2x32xf32>
    %151 = vector.extract_strided_slice %146 {offsets = [0, 96], sizes = [2, 32], strides = [1, 1]} : vector<2x128xf32> to vector<2x32xf32>
    %152 = arith.mulf %149, %136 : vector<2x32xf32>
    %153 = arith.mulf %148, %150 : vector<2x32xf32>
    %154 = arith.addf %152, %153 : vector<2x32xf32>
    %155 = math.tanh %154 : vector<2x32xf32>
    %156 = arith.mulf %151, %155 : vector<2x32xf32>
    %c0_30 = arith.constant 0 : index
    %c0_31 = arith.constant 0 : index
    %157 = vector.load %arg6[%c0_30, %c0_31] : memref<32x32xf32, #tpu.memory_space<vmem>>, vector<32x32xf32>
    %cst_32 = arith.constant dense<0.000000e+00> : vector<2x32xf32>
    %158 = tpu.matmul %156, %157, %cst_32 {dimension_numbers = #tpu.dot_dimension_numbers<[1], [0], [0], [1], [0, 0, 1, 1], [], []>} : vector<2x32xf32>, vector<32x32xf32>, vector<2x32xf32> -> vector<2x32xf32>
    %c0_33 = arith.constant 0 : index
    %c0_34 = arith.constant 0 : index
    %159 = vector.load %arg7[%c0_33, %c0_34] : memref<1x32xf32, #tpu.memory_space<vmem>>, vector<1x32xf32>
    %160 = vector.broadcast %159 : vector<1x32xf32> to vector<2x32xf32>
    %161 = arith.addf %158, %160 : vector<2x32xf32>
    %162 = math.tanh %161 : vector<2x32xf32>
    %c0_35 = arith.constant 0 : index
    %c0_36 = arith.constant 0 : index
    %163 = vector.load %arg8[%c0_35, %c0_36] : memref<32x128xf32, #tpu.memory_space<vmem>>, vector<32x128xf32>
    %cst_37 = arith.constant dense<0.000000e+00> : vector<2x128xf32>
    %164 = tpu.matmul %162, %163, %cst_37 {dimension_numbers = #tpu.dot_dimension_numbers<[1], [0], [0], [1], [0, 0, 1, 1], [], []>} : vector<2x32xf32>, vector<32x128xf32>, vector<2x128xf32> -> vector<2x128xf32>
    %c0_38 = arith.constant 0 : index
    %c0_39 = arith.constant 0 : index
    %165 = vector.load %arg9[%c0_38, %c0_39] : memref<1x128xf32, #tpu.memory_space<vmem>>, vector<1x128xf32>
    %166 = vector.broadcast %165 : vector<1x128xf32> to vector<2x128xf32>
    %167 = arith.addf %164, %166 : vector<2x128xf32>
    %c0_40 = arith.constant 0 : index
    %c0_41 = arith.constant 0 : index
    %168 = vector.load %arg10[%c0_40, %c0_41] : memref<2x128xf32, #tpu.memory_space<vmem>>, vector<2x128xf32>
    tpu.vector_store %arg10[%c0_40, %c0_41], %167 {strides = array<i32>} : memref<2x128xf32, #tpu.memory_space<vmem>>, vector<2x128xf32>,
    return
  }
}

</mosaic_0001>

<llo_original>
// kernel: tpu_custom_call.1
$region0: #{tpu_custom_call.1}
  #allocation0 [shape = 'u32[]', space=smem, size = 0x4, offset = 0x4, fixed_abs, tag = 'smem constant byte address 0x4 - core index']
  #allocation1 [shape = 'u32[144,128]{1,0:T(1,128)}', space=vmem, size = 0x12000, scoped, tag = 'internal scratch']
  %s0 = inlined_call_operand.hbm [shape: f32[16,16], index: 0, kind: input, shape index: {}]
  %s1 = inlined_call_operand.hbm [shape: f32[16,32], index: 1, kind: input, shape index: {}]
  %s2 = inlined_call_operand.hbm [shape: f32[16,32], index: 2, kind: input, shape index: {}]
  %s3 = inlined_call_operand.hbm [shape: f32[32,128], index: 3, kind: input, shape index: {}]
  %s4 = inlined_call_operand.hbm [shape: f32[32,128], index: 4, kind: input, shape index: {}]
  %s5 = inlined_call_operand.vmem [shape: f32[1,128], index: 5, kind: input, shape index: {}]
  %s6 = inlined_call_operand.hbm [shape: f32[32,32], index: 6, kind: input, shape index: {}]
  %s7 = inlined_call_operand.vmem [shape: f32[1,32], index: 7, kind: input, shape index: {}]
  %s8 = inlined_call_operand.hbm [shape: f32[32,128], index: 8, kind: input, shape index: {}]
  %s9 = inlined_call_operand.vmem [shape: f32[1,128], index: 9, kind: input, shape index: {}]
  %s10 = inlined_call_operand.hbm [shape: f32[2,128], index: 10, kind: output, shape index: {}]
  %s11 = sld [smem:[#allocation0]]
  $region78: #{tpu_custom_call.1} parent=0
    _
  %s13 = ssub.s32 1, %s11
  %s14 = scalar_select 0, %s13, %s11
  $region1: #{tpu_custom_call.1} parent=0
    #allocation2 [shape = 'u8[8192]{0}', space=vmem, size = 0x2000, scoped, tag = 'input window, operand 0, single buffered']
    #allocation3 [shape = 's32[1]{0}', space=sflag, size = 0x4, scoped, tag = 'scoped memory for tpu_custom_call.1']
    #allocation4 [shape = 's32[1]{0}', space=sflag, size = 0x4, scoped, tag = 'scoped memory for tpu_custom_call.1']
    #allocation5 [shape = 'u8[8192]{0}', space=vmem, size = 0x2000, scoped, tag = 'input window, operand 1, single buffered']
    #allocation6 [shape = 's32[1]{0}', space=sflag, size = 0x4, scoped, tag = 'scoped memory for tpu_custom_call.1']
    #allocation7 [shape = 'u8[8192]{0}', space=vmem, size = 0x2000, scoped, tag = 'input window, operand 2, single buffered']
    #allocation8 [shape = 'u8[16384]{0}', space=vmem, size = 0x4000, scoped, tag = 'input window, operand 3, single buffered']
    #allocation9 [shape = 's32[1]{0}', space=sflag, size = 0x4, scoped, tag = 'scoped memory for tpu_custom_call.1']
    #allocation10 [shape = 'u8[16384]{0}', space=vmem, size = 0x4000, scoped, tag = 'input window, operand 4, single buffered']
    #allocation11 [shape = 'u8[16384]{0}', space=vmem, size = 0x4000, scoped, tag = 'input window, operand 6, single buffered']
    #allocation12 [shape = 's32[1]{0}', space=sflag, size = 0x4, scoped, tag = 'scoped memory for tpu_custom_call.1']
    #allocation13 [shape = 'u8[16384]{0}', space=vmem, size = 0x4000, scoped, tag = 'input window, operand 8, single buffered']
    #allocation14 [shape = 'u8[1024]{0}', space=vmem, size = 0x400, scoped, tag = 'output window, operand 0, single buffered']
    %15 = vsyncpa [#allocation3], 0
    %16 = vsyncpa [#allocation6], 0
    %17 = vsyncpa [#allocation9], 0
    %18 = vsyncpa [#allocation12], 0
    %19 = vsyncpa [#allocation4], 0
    // Predicated region
    $region2: #{tpu_custom_call.1} parent=1 // pred_check
      _
    $region3: #{tpu_custom_call.1} parent=1 // pred_check_branch
      %21 = sbr.rel (0) target = $region5
    $region4: #{tpu_custom_call.1} parent=1 // pred_region
      %s23 = ssub.s32 256, 256
      %24 = vsyncadd [#allocation3], %s23
      %s25 = sshll.u32 [#allocation2], 4
      %s26 = int_to_ptr.vmem [resolvable:$true] %s25
      %31 = dma.hbm_to_vmem [thread:$0]  %s0, 256, %s26, [#allocation3], 128, 128, 8
    $region5: #{tpu_custom_call.1} parent=1 // pred_fallthru
      _
    // Predicated region
    $region6: #{tpu_custom_call.1} parent=1 // pred_check
      _
    $region7: #{tpu_custom_call.1} parent=1 // pred_check_branch
      %33 = sbr.rel (0) target = $region9
    $region8: #{tpu_custom_call.1} parent=1 // pred_region
      %s35 = ssub.s32 256, 256
      %36 = vsyncadd [#allocation6], %s35
      %s37 = sshll.u32 [#allocation5], 4
      %s38 = int_to_ptr.vmem [resolvable:$true] %s37
      %43 = dma.hbm_to_vmem [thread:$0]  %s1, 256, %s38, [#allocation6], 128, 128, 8
    $region9: #{tpu_custom_call.1} parent=1 // pred_fallthru
      _
    // Predicated region
    $region10: #{tpu_custom_call.1} parent=1 // pred_check
      _
    $region11: #{tpu_custom_call.1} parent=1 // pred_check_branch
      %45 = sbr.rel (0) target = $region13
    $region12: #{tpu_custom_call.1} parent=1 // pred_region
      %s47 = ssub.s32 256, 256
      %48 = vsyncadd [#allocation6], %s47
      %s49 = sshll.u32 [#allocation7], 4
      %s50 = int_to_ptr.vmem [resolvable:$true] %s49
      %55 = dma.hbm_to_vmem [thread:$0]  %s2, 256, %s50, [#allocation6], 128, 128, 8
    $region13: #{tpu_custom_call.1} parent=1 // pred_fallthru
      _
    // Predicated region
    $region14: #{tpu_custom_call.1} parent=1 // pred_check
      _
    $region15: #{tpu_custom_call.1} parent=1 // pred_check_branch
      %57 = sbr.rel (0) target = $region17
    $region16: #{tpu_custom_call.1} parent=1 // pred_region
      %s59 = ssub.s32 512, 512
      %60 = vsyncadd [#allocation9], %s59
      %s61 = sshll.u32 [#allocation8], 4
      %s62 = int_to_ptr.vmem [resolvable:$true] %s61
      %67 = dma.hbm_to_vmem [thread:$0]  %s3, 512, %s62, [#allocation9], 128, 128, 8
    $region17: #{tpu_custom_call.1} parent=1 // pred_fallthru
      _
    // Predicated region
    $region18: #{tpu_custom_call.1} parent=1 // pred_check
      _
    $region19: #{tpu_custom_call.1} parent=1 // pred_check_branch
      %69 = sbr.rel (0) target = $region21
    $region20: #{tpu_custom_call.1} parent=1 // pred_region
      %s71 = ssub.s32 512, 512
      %72 = vsyncadd [#allocation9], %s71
      %s73 = sshll.u32 [#allocation10], 4
      %s74 = int_to_ptr.vmem [resolvable:$true] %s73
      %79 = dma.hbm_to_vmem [thread:$0]  %s4, 512, %s74, [#allocation9], 128, 128, 8
    $region21: #{tpu_custom_call.1} parent=1 // pred_fallthru
      _
    // Predicated region
    $region22: #{tpu_custom_call.1} parent=1 // pred_check
      _
    $region23: #{tpu_custom_call.1} parent=1 // pred_check_branch
      %81 = sbr.rel (0) target = $region25
    $region24: #{tpu_custom_call.1} parent=1 // pred_region
      _
    $region25: #{tpu_custom_call.1} parent=1 // pred_fallthru
      _
    // Predicated region
    $region26: #{tpu_custom_call.1} parent=1 // pred_check
      _
    $region27: #{tpu_custom_call.1} parent=1 // pred_check_branch
      %83 = sbr.rel (0) target = $region29
    $region28: #{tpu_custom_call.1} parent=1 // pred_region
      %s85 = ssub.s32 512, 512
      %86 = vsyncadd [#allocation12], %s85
      %s87 = sshll.u32 [#allocation11], 4
      %s88 = int_to_ptr.vmem [resolvable:$true] %s87
      %93 = dma.hbm_to_vmem [thread:$0]  %s6, 512, %s88, [#allocation12], 128, 128, 8
    $region29: #{tpu_custom_call.1} parent=1 // pred_fallthru
      _
    // Predicated region
    $region30: #{tpu_custom_call.1} parent=1 // pred_check
      _
    $region31: #{tpu_custom_call.1} parent=1 // pred_check_branch
      %95 = sbr.rel (0) target = $region33
    $region32: #{tpu_custom_call.1} parent=1 // pred_region
      _
    $region33: #{tpu_custom_call.1} parent=1 // pred_fallthru
      _
    // Predicated region
    $region34: #{tpu_custom_call.1} parent=1 // pred_check
      _
    $region35: #{tpu_custom_call.1} parent=1 // pred_check_branch
      %97 = sbr.rel (0) target = $region37
    $region36: #{tpu_custom_call.1} parent=1 // pred_region
      %s99 = ssub.s32 512, 512
      %100 = vsyncadd [#allocation12], %s99
      %s101 = sshll.u32 [#allocation13], 4
      %s102 = int_to_ptr.vmem [resolvable:$true] %s101
      %107 = dma.hbm_to_vmem [thread:$0]  %s8, 512, %s102, [#allocation12], 128, 128, 8
    $region37: #{tpu_custom_call.1} parent=1 // pred_fallthru
      _
    // Predicated region
    $region38: #{tpu_custom_call.1} parent=1 // pred_check
      _
    $region39: #{tpu_custom_call.1} parent=1 // pred_check_branch
      %109 = sbr.rel (0) target = $region41
    $region40: #{tpu_custom_call.1} parent=1 // pred_region
      _
    $region41: #{tpu_custom_call.1} parent=1 // pred_fallthru
      _
    // Predicated region
    $region42: #{tpu_custom_call.1} parent=1 // pred_check
      _
    $region43: #{tpu_custom_call.1} parent=1 // pred_check_branch
      %111 = sbr.rel (0) target = $region45
    $region44: #{tpu_custom_call.1} parent=1 // pred_region
      %112 = dma.done [#allocation3], 256
    $region45: #{tpu_custom_call.1} parent=1 // pred_fallthru
      _
    // Predicated region
    $region46: #{tpu_custom_call.1} parent=1 // pred_check
      _
    $region47: #{tpu_custom_call.1} parent=1 // pred_check_branch
      %114 = sbr.rel (0) target = $region49
    $region48: #{tpu_custom_call.1} parent=1 // pred_region
      %115 = dma.done [#allocation6], 256
    $region49: #{tpu_custom_call.1} parent=1 // pred_fallthru
      _
    // Predicated region
    $region50: #{tpu_custom_call.1} parent=1 // pred_check
      _
    $region51: #{tpu_custom_call.1} parent=1 // pred_check_branch
      %117 = sbr.rel (0) target = $region53
    $region52: #{tpu_custom_call.1} parent=1 // pred_region
      %118 = dma.done [#allocation6], 256
    $region53: #{tpu_custom_call.1} parent=1 // pred_fallthru
      _
    // Predicated region
    $region54: #{tpu_custom_call.1} parent=1 // pred_check
      _
    $region55: #{tpu_custom_call.1} parent=1 // pred_check_branch
      %120 = sbr.rel (0) target = $region57
    $region56: #{tpu_custom_call.1} parent=1 // pred_region
      %121 = dma.done [#allocation9], 512
    $region57: #{tpu_custom_call.1} parent=1 // pred_fallthru
      _
    // Predicated region
    $region58: #{tpu_custom_call.1} parent=1 // pred_check
      _
    $region59: #{tpu_custom_call.1} parent=1 // pred_check_branch
      %123 = sbr.rel (0) target = $region61
    $region60: #{tpu_custom_call.1} parent=1 // pred_region
      %124 = dma.done [#allocation9], 512
    $region61: #{tpu_custom_call.1} parent=1 // pred_fallthru
      _
    // Predicated region
    $region62: #{tpu_custom_call.1} parent=1 // pred_check
      _
    $region63: #{tpu_custom_call.1} parent=1 // pred_check_branch
      %126 = sbr.rel (0) target = $region65
    $region64: #{tpu_custom_call.1} parent=1 // pred_region
      %127 = dma.done [#allocation12], 512
    $region65: #{tpu_custom_call.1} parent=1 // pred_fallthru
      _
    // Predicated region
    $region66: #{tpu_custom_call.1} parent=1 // pred_check
      _
    $region67: #{tpu_custom_call.1} parent=1 // pred_check_branch
      %129 = sbr.rel (0) target = $region69
    $region68: #{tpu_custom_call.1} parent=1 // pred_region
      %130 = dma.done [#allocation12], 512
    $region69: #{tpu_custom_call.1} parent=1 // pred_fallthru
      _
    %v131 = vld [vmem:[#allocation2] sm:$0xff]
    %v132 = vld [vmem:[#allocation2 + $0x8] sm:$0xff]
    %v133 = vld [vmem:[#allocation5] sm:$0xff]
    %v134 = vld [vmem:[#allocation5 + $0x8] sm:$0xff]
    %v135 = vld [vmem:[#allocation7] sm:$0xff]
    %v136 = vld [vmem:[#allocation7 + $0x8] sm:$0xff]
    %vm137 = vcmask 130048
    %v139 = vsel %vm137, %v131, 0
    %v142 = vsel %vm137, %v132, 0
    %144 = vmatprep.subr.mxu0 0.0
    %145 = vmatpush1.msra.mxu0 0.0
    %146 = vmatprep.subr.mxu0 0.0
    %147 = vmatpush1.msra.mxu0 0.0
    %148 = vmatprep.subr.mxu0 0.0
    %149 = vmatpush1.msra.mxu0 0.0
    %150 = vmatprep.subr.mxu0 0.0
    %151 = vmatpush1.msra.mxu0 0.0
    %152 = vmatprep.subr.mxu0 0.0
    %153 = vmatpush1.msra.mxu0 0.0
    %154 = vmatprep.subr.mxu0 0.0
    %155 = vmatpush1.msra.mxu0 0.0
    %156 = vmatprep.subr.mxu0 0.0
    %157 = vmatpush1.msra.mxu0 0.0
    %158 = vmatprep.subr.mxu0 0.0
    %159 = vmatpush1.msra.mxu0 0.0
    %160 = vmatprep.subr.mxu0 0.0
    %161 = vmatpush1.msra.mxu0 0.0
    %162 = vmatprep.subr.mxu0 0.0
    %163 = vmatpush1.msra.mxu0 0.0
    %164 = vmatprep.subr.mxu0 0.0
    %165 = vmatpush1.msra.mxu0 0.0
    %166 = vmatprep.subr.mxu0 0.0
    %167 = vmatpush1.msra.mxu0 0.0
    %168 = vmatprep.subr.mxu0 0.0
    %169 = vmatpush1.msra.mxu0 0.0
    %170 = vmatprep.subr.mxu0 0.0
    %171 = vmatpush1.msra.mxu0 0.0
    %172 = vmatprep.subr.mxu0 0.0
    %173 = vmatpush1.msra.mxu0 %v134
    %174 = vmatprep.subr.mxu0 0.0
    %175 = vmatpush1.msra.mxu0 %v133
    %176 = vmatprep.subr.mxu0 0.0
    %177 = vmatpush2.msra.mxu0 0.0
    %178 = vmatprep.subr.mxu0 0.0
    %179 = vmatpush2.msra.mxu0 0.0
    %180 = vmatprep.subr.mxu0 0.0
    %181 = vmatpush2.msra.mxu0 0.0
    %182 = vmatprep.subr.mxu0 0.0
    %183 = vmatpush2.msra.mxu0 0.0
    %184 = vmatprep.subr.mxu0 0.0
    %185 = vmatpush2.msra.mxu0 0.0
    %186 = vmatprep.subr.mxu0 0.0
    %187 = vmatpush2.msra.mxu0 0.0
    %188 = vmatprep.subr.mxu0 0.0
    %189 = vmatpush2.msra.mxu0 0.0
    %190 = vmatprep.subr.mxu0 0.0
    %191 = vmatpush2.msra.mxu0 0.0
    %192 = vmatprep.subr.mxu0 0.0
    %193 = vmatpush2.msra.mxu0 0.0
    %194 = vmatprep.subr.mxu0 0.0
    %195 = vmatpush2.msra.mxu0 0.0
    %196 = vmatprep.subr.mxu0 0.0
    %197 = vmatpush2.msra.mxu0 0.0
    %198 = vmatprep.subr.mxu0 0.0
    %199 = vmatpush2.msra.mxu0 0.0
    %200 = vmatprep.subr.mxu0 0.0
    %201 = vmatpush2.msra.mxu0 0.0
    %202 = vmatprep.subr.mxu0 0.0
    %203 = vmatpush2.msra.mxu0 0.0
    %204 = vmatprep.subr.mxu0 0.0
    %205 = vmatpush2.msra.mxu0 0.0
    %206 = vmatprep.subr.mxu0 0.0
    %207 = vmatpush2.msra.mxu0 0.0
    %208 = vmatprep.mubr.f32.mxu0 0.0
    %209 = vmatmul.mubr.f32.gmra.mxu0 %v139
    %v210 = vpop.f32.mrf.mxu0
    %v211 = vadd.f32 %v135, %v210
    %v212 = vpop.f32.mrf.mxu0
    %213 = vmatprep.mubr.f32.mxu0 0.0
    %214 = vmatmul.mubr.f32.gmra.mxu0 %v142
    %v215 = vpop.f32.mrf.mxu0
    %v216 = vadd.f32 %v136, %v215
    %v217 = vpop.f32.mrf.mxu0
    %218 = vdwg.mxu0
    %v219 = vld [vmem:[#allocation8] sm:$0xff]
    %v220 = vld [vmem:[#allocation8 + $0x8] sm:$0xff]
    %v221 = vld [vmem:[#allocation8 + $0x10] sm:$0xff]
    %v222 = vld [vmem:[#allocation8 + $0x18] sm:$0xff]
    %v223 = vld [vmem:[%s5] sm:$0x1]
    %v225 = vlaneseq
    %v226 = vshrl.u32 %v225, 7
    %v227 = vsub.s32 0, %v226
    %v228 = vrot.slane %v223, %v227
    %vm230 = vcmask 261120
    %v232 = vsel %vm230, %v211, 0
    %v235 = vsel %vm230, %v216, 0
    %237 = vmatprep.subr.mxu0 0.0
    %238 = vmatpush1.msra.mxu0 0.0
    %239 = vmatprep.subr.mxu0 0.0
    %240 = vmatpush1.msra.mxu0 0.0
    %241 = vmatprep.subr.mxu0 0.0
    %242 = vmatpush1.msra.mxu0 0.0
    %243 = vmatprep.subr.mxu0 0.0
    %244 = vmatpush1.msra.mxu0 0.0
    %245 = vmatprep.subr.mxu0 0.0
    %246 = vmatpush1.msra.mxu0 0.0
    %247 = vmatprep.subr.mxu0 0.0
    %248 = vmatpush1.msra.mxu0 0.0
    %249 = vmatprep.subr.mxu0 0.0
    %250 = vmatpush1.msra.mxu0 0.0
    %251 = vmatprep.subr.mxu0 0.0
    %252 = vmatpush1.msra.mxu0 0.0
    %253 = vmatprep.subr.mxu0 0.0
    %254 = vmatpush1.msra.mxu0 0.0
    %255 = vmatprep.subr.mxu0 0.0
    %256 = vmatpush1.msra.mxu0 0.0
    %257 = vmatprep.subr.mxu0 0.0
    %258 = vmatpush1.msra.mxu0 0.0
    %259 = vmatprep.subr.mxu0 0.0
    %260 = vmatpush1.msra.mxu0 0.0
    %261 = vmatprep.subr.mxu0 0.0
    %262 = vmatpush1.msra.mxu0 %v222
    %263 = vmatprep.subr.mxu0 0.0
    %264 = vmatpush1.msra.mxu0 %v221
    %265 = vmatprep.subr.mxu0 0.0
    %266 = vmatpush1.msra.mxu0 %v220
    %267 = vmatprep.subr.mxu0 0.0
    %268 = vmatpush1.msra.mxu0 %v219
    %269 = vmatprep.subr.mxu0 0.0
    %270 = vmatpush2.msra.mxu0 0.0
    %271 = vmatprep.subr.mxu0 0.0
    %272 = vmatpush2.msra.mxu0 0.0
    %273 = vmatprep.subr.mxu0 0.0
    %274 = vmatpush2.msra.mxu0 0.0
    %275 = vmatprep.subr.mxu0 0.0
    %276 = vmatpush2.msra.mxu0 0.0
    %277 = vmatprep.subr.mxu0 0.0
    %278 = vmatpush2.msra.mxu0 0.0
    %279 = vmatprep.subr.mxu0 0.0
    %280 = vmatpush2.msra.mxu0 0.0
    %281 = vmatprep.subr.mxu0 0.0
    %282 = vmatpush2.msra.mxu0 0.0
    %283 = vmatprep.subr.mxu0 0.0
    %284 = vmatpush2.msra.mxu0 0.0
    %285 = vmatprep.subr.mxu0 0.0
    %286 = vmatpush2.msra.mxu0 0.0
    %287 = vmatprep.subr.mxu0 0.0
    %288 = vmatpush2.msra.mxu0 0.0
    %289 = vmatprep.subr.mxu0 0.0
    %290 = vmatpush2.msra.mxu0 0.0
    %291 = vmatprep.subr.mxu0 0.0
    %292 = vmatpush2.msra.mxu0 0.0
    %293 = vmatprep.subr.mxu0 0.0
    %294 = vmatpush2.msra.mxu0 0.0
    %295 = vmatprep.subr.mxu0 0.0
    %296 = vmatpush2.msra.mxu0 0.0
    %297 = vmatprep.subr.mxu0 0.0
    %298 = vmatpush2.msra.mxu0 0.0
    %299 = vmatprep.subr.mxu0 0.0
    %300 = vmatpush2.msra.mxu0 0.0
    %301 = vmatprep.mubr.f32.mxu0 0.0
    %302 = vmatmul.mubr.f32.gmra.mxu0 %v232
    %v303 = vpop.f32.mrf.mxu0
    %v304 = vadd.f32 %v228, %v303
    %v305 = vpop.f32.mrf.mxu0
    %306 = vmatprep.mubr.f32.mxu0 0.0
    %307 = vmatmul.mubr.f32.gmra.mxu0 %v235
    %v308 = vpop.f32.mrf.mxu0
    %v309 = vadd.f32 %v228, %v308
    %v310 = vpop.f32.mrf.mxu0
    %311 = vdwg.mxu0
    %v312 = vld [vmem:[#allocation10] sm:$0xff]
    %v313 = vld [vmem:[#allocation10 + $0x8] sm:$0xff]
    %v314 = vld [vmem:[#allocation10 + $0x10] sm:$0xff]
    %v315 = vld [vmem:[#allocation10 + $0x18] sm:$0xff]
    %v317 = vsel %vm230, 0.0, 0
    %319 = vmatprep.subr.mxu0 0.0
    %320 = vmatpush1.msra.mxu0 0.0
    %321 = vmatprep.subr.mxu0 0.0
    %322 = vmatpush1.msra.mxu0 0.0
    %323 = vmatprep.subr.mxu0 0.0
    %324 = vmatpush1.msra.mxu0 0.0
    %325 = vmatprep.subr.mxu0 0.0
    %326 = vmatpush1.msra.mxu0 0.0
    %327 = vmatprep.subr.mxu0 0.0
    %328 = vmatpush1.msra.mxu0 0.0
    %329 = vmatprep.subr.mxu0 0.0
    %330 = vmatpush1.msra.mxu0 0.0
    %331 = vmatprep.subr.mxu0 0.0
    %332 = vmatpush1.msra.mxu0 0.0
    %333 = vmatprep.subr.mxu0 0.0
    %334 = vmatpush1.msra.mxu0 0.0
    %335 = vmatprep.subr.mxu0 0.0
    %336 = vmatpush1.msra.mxu0 0.0
    %337 = vmatprep.subr.mxu0 0.0
    %338 = vmatpush1.msra.mxu0 0.0
    %339 = vmatprep.subr.mxu0 0.0
    %340 = vmatpush1.msra.mxu0 0.0
    %341 = vmatprep.subr.mxu0 0.0
    %342 = vmatpush1.msra.mxu0 0.0
    %343 = vmatprep.subr.mxu0 0.0
    %344 = vmatpush1.msra.mxu0 %v315
    %345 = vmatprep.subr.mxu0 0.0
    %346 = vmatpush1.msra.mxu0 %v314
    %347 = vmatprep.subr.mxu0 0.0
    %348 = vmatpush1.msra.mxu0 %v313
    %349 = vmatprep.subr.mxu0 0.0
    %350 = vmatpush1.msra.mxu0 %v312
    %351 = vmatprep.subr.mxu0 0.0
    %352 = vmatpush2.msra.mxu0 0.0
    %353 = vmatprep.subr.mxu0 0.0
    %354 = vmatpush2.msra.mxu0 0.0
    %355 = vmatprep.subr.mxu0 0.0
    %356 = vmatpush2.msra.mxu0 0.0
    %357 = vmatprep.subr.mxu0 0.0
    %358 = vmatpush2.msra.mxu0 0.0
    %359 = vmatprep.subr.mxu0 0.0
    %360 = vmatpush2.msra.mxu0 0.0
    %361 = vmatprep.subr.mxu0 0.0
    %362 = vmatpush2.msra.mxu0 0.0
    %363 = vmatprep.subr.mxu0 0.0
    %364 = vmatpush2.msra.mxu0 0.0
    %365 = vmatprep.subr.mxu0 0.0
    %366 = vmatpush2.msra.mxu0 0.0
    %367 = vmatprep.subr.mxu0 0.0
    %368 = vmatpush2.msra.mxu0 0.0
    %369 = vmatprep.subr.mxu0 0.0
    %370 = vmatpush2.msra.mxu0 0.0
    %371 = vmatprep.subr.mxu0 0.0
    %372 = vmatpush2.msra.mxu0 0.0
    %373 = vmatprep.subr.mxu0 0.0
    %374 = vmatpush2.msra.mxu0 0.0
    %375 = vmatprep.subr.mxu0 0.0
    %376 = vmatpush2.msra.mxu0 0.0
    %377 = vmatprep.subr.mxu0 0.0
    %378 = vmatpush2.msra.mxu0 0.0
    %379 = vmatprep.subr.mxu0 0.0
    %380 = vmatpush2.msra.mxu0 0.0
    %381 = vmatprep.subr.mxu0 0.0
    %382 = vmatpush2.msra.mxu0 0.0
    %383 = vmatprep.mubr.f32.mxu0 0.0
    %384 = vmatmul.mubr.f32.gmra.mxu0 %v317
    %v385 = vpop.f32.mrf.mxu0
    %v386 = vadd.f32 0.0, %v385
    %v387 = vpop.f32.mrf.mxu0
    %388 = vdwg.mxu0
    %v389 = vadd.f32 %v304, %v386
    %v390 = vxor.u32 %v389, 2147483648
    %v391 = vmul.f32 %v390, 1.442695
    %v392 = vpow.pop %v391
    %v393 = vadd.f32 %v392, 1.0
    %v394 = vrcp.pop %v393
    %v395 = vmul.f32 1.0, %v394
    %v396 = vtanh.pop %v389
    %v397 = vmul.f32 %v395, 0.0
    %399 = vrot.lane.b32.xlu0 %v396, 64
    %v400 = vpop.permute.xlu0 %399
    %v402 = vmul.f32 %v395, %v400
    %404 = vrot.lane.b32.xlu0 %v402, 32
    %v405 = vpop.permute.xlu0 %404
    %v407 = vadd.f32 %v397, %v405
    %v408 = vtanh.pop %v407
    %410 = vrot.lane.b32.xlu0 %v408, 64
    %v411 = vpop.permute.xlu0 %410
    %v413 = vmul.f32 %v395, %v411
    %415 = vrot.lane.b32.xlu0 %v413, 32
    %v416 = vpop.permute.xlu0 %415
    %v417 = vsel %vm230, %v416, 0
    %419 = vmatprep.subr.mxu0 0.0
    %420 = vmatpush1.msra.mxu0 0.0
    %421 = vmatprep.subr.mxu0 0.0
    %422 = vmatpush1.msra.mxu0 0.0
    %423 = vmatprep.subr.mxu0 0.0
    %424 = vmatpush1.msra.mxu0 0.0
    %425 = vmatprep.subr.mxu0 0.0
    %426 = vmatpush1.msra.mxu0 0.0
    %427 = vmatprep.subr.mxu0 0.0
    %428 = vmatpush1.msra.mxu0 0.0
    %429 = vmatprep.subr.mxu0 0.0
    %430 = vmatpush1.msra.mxu0 0.0
    %431 = vmatprep.subr.mxu0 0.0
    %432 = vmatpush1.msra.mxu0 0.0
    %433 = vmatprep.subr.mxu0 0.0
    %434 = vmatpush1.msra.mxu0 0.0
    %435 = vmatprep.subr.mxu0 0.0
    %436 = vmatpush1.msra.mxu0 0.0
    %437 = vmatprep.subr.mxu0 0.0
    %438 = vmatpush1.msra.mxu0 0.0
    %439 = vmatprep.subr.mxu0 0.0
    %440 = vmatpush1.msra.mxu0 0.0
    %441 = vmatprep.subr.mxu0 0.0
    %442 = vmatpush1.msra.mxu0 0.0
    %443 = vmatprep.subr.mxu0 0.0
    %444 = vmatpush1.msra.mxu0 %v315
    %445 = vmatprep.subr.mxu0 0.0
    %446 = vmatpush1.msra.mxu0 %v314
    %447 = vmatprep.subr.mxu0 0.0
    %448 = vmatpush1.msra.mxu0 %v313
    %449 = vmatprep.subr.mxu0 0.0
    %450 = vmatpush1.msra.mxu0 %v312
    %451 = vmatprep.subr.mxu0 0.0
    %452 = vmatpush2.msra.mxu0 0.0
    %453 = vmatprep.subr.mxu0 0.0
    %454 = vmatpush2.msra.mxu0 0.0
    %455 = vmatprep.subr.mxu0 0.0
    %456 = vmatpush2.msra.mxu0 0.0
    %457 = vmatprep.subr.mxu0 0.0
    %458 = vmatpush2.msra.mxu0 0.0
    %459 = vmatprep.subr.mxu0 0.0
    %460 = vmatpush2.msra.mxu0 0.0
    %461 = vmatprep.subr.mxu0 0.0
    %462 = vmatpush2.msra.mxu0 0.0
    %463 = vmatprep.subr.mxu0 0.0
    %464 = vmatpush2.msra.mxu0 0.0
    %465 = vmatprep.subr.mxu0 0.0
    %466 = vmatpush2.msra.mxu0 0.0
    %467 = vmatprep.subr.mxu0 0.0
    %468 = vmatpush2.msra.mxu0 0.0
    %469 = vmatprep.subr.mxu0 0.0
    %470 = vmatpush2.msra.mxu0 0.0
    %471 = vmatprep.subr.mxu0 0.0
    %472 = vmatpush2.msra.mxu0 0.0
    %473 = vmatprep.subr.mxu0 0.0
    %474 = vmatpush2.msra.mxu0 0.0
    %475 = vmatprep.subr.mxu0 0.0
    %476 = vmatpush2.msra.mxu0 0.0
    %477 = vmatprep.subr.mxu0 0.0
    %478 = vmatpush2.msra.mxu0 0.0
    %479 = vmatprep.subr.mxu0 0.0
    %480 = vmatpush2.msra.mxu0 0.0
    %481 = vmatprep.subr.mxu0 0.0
    %482 = vmatpush2.msra.mxu0 0.0
    %483 = vmatprep.mubr.f32.mxu0 0.0
    %484 = vmatmul.mubr.f32.gmra.mxu0 %v417
    %v485 = vpop.f32.mrf.mxu0
    %v486 = vadd.f32 0.0, %v485
    %v487 = vpop.f32.mrf.mxu0
    %488 = vdwg.mxu0
    %v490 = vrot.slane %v486, 6
    %v492 = vadd.f32 %v304, %v490
    %v493 = vxor.u32 %v492, 2147483648
    %v494 = vmul.f32 %v493, 1.442695
    %v495 = vpow.pop %v494
    %v496 = vadd.f32 %v495, 1.0
    %v497 = vrcp.pop %v496
    %v498 = vmul.f32 1.0, %v497
    %v499 = vtanh.pop %v492
    %v501 = vrot.slane %v407, 6
    %v503 = vmul.f32 %v498, %v501
    %505 = vrot.lane.b32.xlu0 %v499, 64
    %v506 = vpop.permute.xlu0 %505
    %v508 = vmul.f32 %v498, %v506
    %510 = vrot.lane.b32.xlu0 %v508, 32
    %v511 = vpop.permute.xlu0 %510
    %v513 = vadd.f32 %v503, %v511
    %v514 = vtanh.pop %v513
    %516 = vrot.lane.b32.xlu0 %v514, 64
    %v517 = vpop.permute.xlu0 %516
    %v519 = vmul.f32 %v498, %v517
    %v521 = vrot.slane %v519, 2
    %522 = vrot.lane.b32.xlu0 %v521, 32
    %v523 = vpop.permute.xlu0 %522
    %v524 = vsel %vm230, %v523, 0
    %526 = vmatprep.subr.mxu0 0.0
    %527 = vmatpush1.msra.mxu0 0.0
    %528 = vmatprep.subr.mxu0 0.0
    %529 = vmatpush1.msra.mxu0 0.0
    %530 = vmatprep.subr.mxu0 0.0
    %531 = vmatpush1.msra.mxu0 0.0
    %532 = vmatprep.subr.mxu0 0.0
    %533 = vmatpush1.msra.mxu0 0.0
    %534 = vmatprep.subr.mxu0 0.0
    %535 = vmatpush1.msra.mxu0 0.0
    %536 = vmatprep.subr.mxu0 0.0
    %537 = vmatpush1.msra.mxu0 0.0
    %538 = vmatprep.subr.mxu0 0.0
    %539 = vmatpush1.msra.mxu0 0.0
    %540 = vmatprep.subr.mxu0 0.0
    %541 = vmatpush1.msra.mxu0 0.0
    %542 = vmatprep.subr.mxu0 0.0
    %543 = vmatpush1.msra.mxu0 0.0
    %544 = vmatprep.subr.mxu0 0.0
    %545 = vmatpush1.msra.mxu0 0.0
    %546 = vmatprep.subr.mxu0 0.0
    %547 = vmatpush1.msra.mxu0 0.0
    %548 = vmatprep.subr.mxu0 0.0
    %549 = vmatpush1.msra.mxu0 0.0
    %550 = vmatprep.subr.mxu0 0.0
    %551 = vmatpush1.msra.mxu0 %v315
    %552 = vmatprep.subr.mxu0 0.0
    %553 = vmatpush1.msra.mxu0 %v314
    %554 = vmatprep.subr.mxu0 0.0
    %555 = vmatpush1.msra.mxu0 %v313
    %556 = vmatprep.subr.mxu0 0.0
    %557 = vmatpush1.msra.mxu0 %v312
    %558 = vmatprep.subr.mxu0 0.0
    %559 = vmatpush2.msra.mxu0 0.0
    %560 = vmatprep.subr.mxu0 0.0
    %561 = vmatpush2.msra.mxu0 0.0
    %562 = vmatprep.subr.mxu0 0.0
    %563 = vmatpush2.msra.mxu0 0.0
    %564 = vmatprep.subr.mxu0 0.0
    %565 = vmatpush2.msra.mxu0 0.0
    %566 = vmatprep.subr.mxu0 0.0
    %567 = vmatpush2.msra.mxu0 0.0
    %568 = vmatprep.subr.mxu0 0.0
    %569 = vmatpush2.msra.mxu0 0.0
    %570 = vmatprep.subr.mxu0 0.0
    %571 = vmatpush2.msra.mxu0 0.0
    %572 = vmatprep.subr.mxu0 0.0
    %573 = vmatpush2.msra.mxu0 0.0
    %574 = vmatprep.subr.mxu0 0.0
    %575 = vmatpush2.msra.mxu0 0.0
    %576 = vmatprep.subr.mxu0 0.0
    %577 = vmatpush2.msra.mxu0 0.0
    %578 = vmatprep.subr.mxu0 0.0
    %579 = vmatpush2.msra.mxu0 0.0
    %580 = vmatprep.subr.mxu0 0.0
    %581 = vmatpush2.msra.mxu0 0.0
    %582 = vmatprep.subr.mxu0 0.0
    %583 = vmatpush2.msra.mxu0 0.0
    %584 = vmatprep.subr.mxu0 0.0
    %585 = vmatpush2.msra.mxu0 0.0
    %586 = vmatprep.subr.mxu0 0.0
    %587 = vmatpush2.msra.mxu0 0.0
    %588 = vmatprep.subr.mxu0 0.0
    %589 = vmatpush2.msra.mxu0 0.0
    %590 = vmatprep.mubr.f32.mxu0 0.0
    %591 = vmatmul.mubr.f32.gmra.mxu0 %v524
    %v592 = vpop.f32.mrf.mxu0
    %v593 = vadd.f32 0.0, %v592
    %v594 = vpop.f32.mrf.mxu0
    %595 = vdwg.mxu0
    %v597 = vrot.slane %v593, 4
    %v599 = vadd.f32 %v304, %v597
    %v600 = vxor.u32 %v599, 2147483648
    %v601 = vmul.f32 %v600, 1.442695
    %v602 = vpow.pop %v601
    %v603 = vadd.f32 %v602, 1.0
    %v604 = vrcp.pop %v603
    %v605 = vmul.f32 1.0, %v604
    %v606 = vtanh.pop %v599
    %v608 = vrot.slane %v513, 6
    %v610 = vmul.f32 %v605, %v608
    %612 = vrot.lane.b32.xlu0 %v606, 64
    %v613 = vpop.permute.xlu0 %612
    %v615 = vmul.f32 %v605, %v613
    %617 = vrot.lane.b32.xlu0 %v615, 32
    %v618 = vpop.permute.xlu0 %617
    %v620 = vadd.f32 %v610, %v618
    %v621 = vtanh.pop %v620
    %623 = vrot.lane.b32.xlu0 %v621, 64
    %v624 = vpop.permute.xlu0 %623
    %v626 = vmul.f32 %v605, %v624
    %v628 = vrot.slane %v626, 4
    %629 = vrot.lane.b32.xlu0 %v628, 32
    %v630 = vpop.permute.xlu0 %629
    %v631 = vsel %vm230, %v630, 0
    %633 = vmatprep.subr.mxu0 0.0
    %634 = vmatpush1.msra.mxu0 0.0
    %635 = vmatprep.subr.mxu0 0.0
    %636 = vmatpush1.msra.mxu0 0.0
    %637 = vmatprep.subr.mxu0 0.0
    %638 = vmatpush1.msra.mxu0 0.0
    %639 = vmatprep.subr.mxu0 0.0
    %640 = vmatpush1.msra.mxu0 0.0
    %641 = vmatprep.subr.mxu0 0.0
    %642 = vmatpush1.msra.mxu0 0.0
    %643 = vmatprep.subr.mxu0 0.0
    %644 = vmatpush1.msra.mxu0 0.0
    %645 = vmatprep.subr.mxu0 0.0
    %646 = vmatpush1.msra.mxu0 0.0
    %647 = vmatprep.subr.mxu0 0.0
    %648 = vmatpush1.msra.mxu0 0.0
    %649 = vmatprep.subr.mxu0 0.0
    %650 = vmatpush1.msra.mxu0 0.0
    %651 = vmatprep.subr.mxu0 0.0
    %652 = vmatpush1.msra.mxu0 0.0
    %653 = vmatprep.subr.mxu0 0.0
    %654 = vmatpush1.msra.mxu0 0.0
    %655 = vmatprep.subr.mxu0 0.0
    %656 = vmatpush1.msra.mxu0 0.0
    %657 = vmatprep.subr.mxu0 0.0
    %658 = vmatpush1.msra.mxu0 %v315
    %659 = vmatprep.subr.mxu0 0.0
    %660 = vmatpush1.msra.mxu0 %v314
    %661 = vmatprep.subr.mxu0 0.0
    %662 = vmatpush1.msra.mxu0 %v313
    %663 = vmatprep.subr.mxu0 0.0
    %664 = vmatpush1.msra.mxu0 %v312
    %665 = vmatprep.subr.mxu0 0.0
    %666 = vmatpush2.msra.mxu0 0.0
    %667 = vmatprep.subr.mxu0 0.0
    %668 = vmatpush2.msra.mxu0 0.0
    %669 = vmatprep.subr.mxu0 0.0
    %670 = vmatpush2.msra.mxu0 0.0
    %671 = vmatprep.subr.mxu0 0.0
    %672 = vmatpush2.msra.mxu0 0.0
    %673 = vmatprep.subr.mxu0 0.0
    %674 = vmatpush2.msra.mxu0 0.0
    %675 = vmatprep.subr.mxu0 0.0
    %676 = vmatpush2.msra.mxu0 0.0
    %677 = vmatprep.subr.mxu0 0.0
    %678 = vmatpush2.msra.mxu0 0.0
    %679 = vmatprep.subr.mxu0 0.0
    %680 = vmatpush2.msra.mxu0 0.0
    %681 = vmatprep.subr.mxu0 0.0
    %682 = vmatpush2.msra.mxu0 0.0
    %683 = vmatprep.subr.mxu0 0.0
    %684 = vmatpush2.msra.mxu0 0.0
    %685 = vmatprep.subr.mxu0 0.0
    %686 = vmatpush2.msra.mxu0 0.0
    %687 = vmatprep.subr.mxu0 0.0
    %688 = vmatpush2.msra.mxu0 0.0
    %689 = vmatprep.subr.mxu0 0.0
    %690 = vmatpush2.msra.mxu0 0.0
    %691 = vmatprep.subr.mxu0 0.0
    %692 = vmatpush2.msra.mxu0 0.0
    %693 = vmatprep.subr.mxu0 0.0
    %694 = vmatpush2.msra.mxu0 0.0
    %695 = vmatprep.subr.mxu0 0.0
    %696 = vmatpush2.msra.mxu0 0.0
    %697 = vmatprep.mubr.f32.mxu0 0.0
    %698 = vmatmul.mubr.f32.gmra.mxu0 %v631
    %v699 = vpop.f32.mrf.mxu0
    %v700 = vadd.f32 0.0, %v699
    %v701 = vpop.f32.mrf.mxu0
    %702 = vdwg.mxu0
    %v704 = vrot.slane %v700, 2
    %v706 = vadd.f32 %v304, %v704
    %v707 = vxor.u32 %v706, 2147483648
    %v708 = vmul.f32 %v707, 1.442695
    %v709 = vpow.pop %v708
    %v710 = vadd.f32 %v709, 1.0
    %v711 = vrcp.pop %v710
    %v712 = vmul.f32 1.0, %v711
    %v713 = vtanh.pop %v706
    %v715 = vrot.slane %v620, 6
    %v717 = vmul.f32 %v712, %v715
    %719 = vrot.lane.b32.xlu0 %v713, 64
    %v720 = vpop.permute.xlu0 %719
    %v722 = vmul.f32 %v712, %v720
    %724 = vrot.lane.b32.xlu0 %v722, 32
    %v725 = vpop.permute.xlu0 %724
    %v727 = vadd.f32 %v717, %v725
    %v728 = vtanh.pop %v727
    %730 = vrot.lane.b32.xlu0 %v728, 64
    %v731 = vpop.permute.xlu0 %730
    %v733 = vmul.f32 %v712, %v731
    %v735 = vrot.slane %v733, 6
    %736 = vrot.lane.b32.xlu0 %v735, 32
    %v737 = vpop.permute.xlu0 %736
    %v738 = vsel %vm230, %v737, 0
    %740 = vmatprep.subr.mxu0 0.0
    %741 = vmatpush1.msra.mxu0 0.0
    %742 = vmatprep.subr.mxu0 0.0
    %743 = vmatpush1.msra.mxu0 0.0
    %744 = vmatprep.subr.mxu0 0.0
    %745 = vmatpush1.msra.mxu0 0.0
    %746 = vmatprep.subr.mxu0 0.0
    %747 = vmatpush1.msra.mxu0 0.0
    %748 = vmatprep.subr.mxu0 0.0
    %749 = vmatpush1.msra.mxu0 0.0
    %750 = vmatprep.subr.mxu0 0.0
    %751 = vmatpush1.msra.mxu0 0.0
    %752 = vmatprep.subr.mxu0 0.0
    %753 = vmatpush1.msra.mxu0 0.0
    %754 = vmatprep.subr.mxu0 0.0
    %755 = vmatpush1.msra.mxu0 0.0
    %756 = vmatprep.subr.mxu0 0.0
    %757 = vmatpush1.msra.mxu0 0.0
    %758 = vmatprep.subr.mxu0 0.0
    %759 = vmatpush1.msra.mxu0 0.0
    %760 = vmatprep.subr.mxu0 0.0
    %761 = vmatpush1.msra.mxu0 0.0
    %762 = vmatprep.subr.mxu0 0.0
    %763 = vmatpush1.msra.mxu0 0.0
    %764 = vmatprep.subr.mxu0 0.0
    %765 = vmatpush1.msra.mxu0 %v315
    %766 = vmatprep.subr.mxu0 0.0
    %767 = vmatpush1.msra.mxu0 %v314
    %768 = vmatprep.subr.mxu0 0.0
    %769 = vmatpush1.msra.mxu0 %v313
    %770 = vmatprep.subr.mxu0 0.0
    %771 = vmatpush1.msra.mxu0 %v312
    %772 = vmatprep.subr.mxu0 0.0
    %773 = vmatpush2.msra.mxu0 0.0
    %774 = vmatprep.subr.mxu0 0.0
    %775 = vmatpush2.msra.mxu0 0.0
    %776 = vmatprep.subr.mxu0 0.0
    %777 = vmatpush2.msra.mxu0 0.0
    %778 = vmatprep.subr.mxu0 0.0
    %779 = vmatpush2.msra.mxu0 0.0
    %780 = vmatprep.subr.mxu0 0.0
    %781 = vmatpush2.msra.mxu0 0.0
    %782 = vmatprep.subr.mxu0 0.0
    %783 = vmatpush2.msra.mxu0 0.0
    %784 = vmatprep.subr.mxu0 0.0
    %785 = vmatpush2.msra.mxu0 0.0
    %786 = vmatprep.subr.mxu0 0.0
    %787 = vmatpush2.msra.mxu0 0.0
    %788 = vmatprep.subr.mxu0 0.0
    %789 = vmatpush2.msra.mxu0 0.0
    %790 = vmatprep.subr.mxu0 0.0
    %791 = vmatpush2.msra.mxu0 0.0
    %792 = vmatprep.subr.mxu0 0.0
    %793 = vmatpush2.msra.mxu0 0.0
    %794 = vmatprep.subr.mxu0 0.0
    %795 = vmatpush2.msra.mxu0 0.0
    %796 = vmatprep.subr.mxu0 0.0
    %797 = vmatpush2.msra.mxu0 0.0
    %798 = vmatprep.subr.mxu0 0.0
    %799 = vmatpush2.msra.mxu0 0.0
    %800 = vmatprep.subr.mxu0 0.0
    %801 = vmatpush2.msra.mxu0 0.0
    %802 = vmatprep.subr.mxu0 0.0
    %803 = vmatpush2.msra.mxu0 0.0
    %804 = vmatprep.mubr.f32.mxu0 0.0
    %805 = vmatmul.mubr.f32.gmra.mxu0 %v738
    %v806 = vpop.f32.mrf.mxu0
    %v807 = vadd.f32 0.0, %v806
    %v808 = vpop.f32.mrf.mxu0
    %809 = vdwg.mxu0
    %v810 = vadd.f32 %v309, %v807
    %v811 = vxor.u32 %v810, 2147483648
    %v812 = vmul.f32 %v811, 1.442695
    %v813 = vpow.pop %v812
    %v814 = vadd.f32 %v813, 1.0
    %v815 = vrcp.pop %v814
    %v816 = vmul.f32 1.0, %v815
    %v817 = vtanh.pop %v810
    %v819 = vrot.slane %v727, 6
    %v821 = vmul.f32 %v816, %v819
    %823 = vrot.lane.b32.xlu0 %v817, 64
    %v824 = vpop.permute.xlu0 %823
    %v826 = vmul.f32 %v816, %v824
    %828 = vrot.lane.b32.xlu0 %v826, 32
    %v829 = vpop.permute.xlu0 %828
    %v831 = vadd.f32 %v821, %v829
    %v832 = vtanh.pop %v831
    %834 = vrot.lane.b32.xlu0 %v832, 64
    %v835 = vpop.permute.xlu0 %834
    %v837 = vmul.f32 %v816, %v835
    %839 = vrot.lane.b32.xlu0 %v837, 32
    %v840 = vpop.permute.xlu0 %839
    %v841 = vsel %vm230, %v840, 0
    %843 = vmatprep.subr.mxu0 0.0
    %844 = vmatpush1.msra.mxu0 0.0
    %845 = vmatprep.subr.mxu0 0.0
    %846 = vmatpush1.msra.mxu0 0.0
    %847 = vmatprep.subr.mxu0 0.0
    %848 = vmatpush1.msra.mxu0 0.0
    %849 = vmatprep.subr.mxu0 0.0
    %850 = vmatpush1.msra.mxu0 0.0
    %851 = vmatprep.subr.mxu0 0.0
    %852 = vmatpush1.msra.mxu0 0.0
    %853 = vmatprep.subr.mxu0 0.0
    %854 = vmatpush1.msra.mxu0 0.0
    %855 = vmatprep.subr.mxu0 0.0
    %856 = vmatpush1.msra.mxu0 0.0
    %857 = vmatprep.subr.mxu0 0.0
    %858 = vmatpush1.msra.mxu0 0.0
    %859 = vmatprep.subr.mxu0 0.0
    %860 = vmatpush1.msra.mxu0 0.0
    %861 = vmatprep.subr.mxu0 0.0
    %862 = vmatpush1.msra.mxu0 0.0
    %863 = vmatprep.subr.mxu0 0.0
    %864 = vmatpush1.msra.mxu0 0.0
    %865 = vmatprep.subr.mxu0 0.0
    %866 = vmatpush1.msra.mxu0 0.0
    %867 = vmatprep.subr.mxu0 0.0
    %868 = vmatpush1.msra.mxu0 %v315
    %869 = vmatprep.subr.mxu0 0.0
    %870 = vmatpush1.msra.mxu0 %v314
    %871 = vmatprep.subr.mxu0 0.0
    %872 = vmatpush1.msra.mxu0 %v313
    %873 = vmatprep.subr.mxu0 0.0
    %874 = vmatpush1.msra.mxu0 %v312
    %875 = vmatprep.subr.mxu0 0.0
    %876 = vmatpush2.msra.mxu0 0.0
    %877 = vmatprep.subr.mxu0 0.0
    %878 = vmatpush2.msra.mxu0 0.0
    %879 = vmatprep.subr.mxu0 0.0
    %880 = vmatpush2.msra.mxu0 0.0
    %881 = vmatprep.subr.mxu0 0.0
    %882 = vmatpush2.msra.mxu0 0.0
    %883 = vmatprep.subr.mxu0 0.0
    %884 = vmatpush2.msra.mxu0 0.0
    %885 = vmatprep.subr.mxu0 0.0
    %886 = vmatpush2.msra.mxu0 0.0
    %887 = vmatprep.subr.mxu0 0.0
    %888 = vmatpush2.msra.mxu0 0.0
    %889 = vmatprep.subr.mxu0 0.0
    %890 = vmatpush2.msra.mxu0 0.0
    %891 = vmatprep.subr.mxu0 0.0
    %892 = vmatpush2.msra.mxu0 0.0
    %893 = vmatprep.subr.mxu0 0.0
    %894 = vmatpush2.msra.mxu0 0.0
    %895 = vmatprep.subr.mxu0 0.0
    %896 = vmatpush2.msra.mxu0 0.0
    %897 = vmatprep.subr.mxu0 0.0
    %898 = vmatpush2.msra.mxu0 0.0
    %899 = vmatprep.subr.mxu0 0.0
    %900 = vmatpush2.msra.mxu0 0.0
    %901 = vmatprep.subr.mxu0 0.0
    %902 = vmatpush2.msra.mxu0 0.0
    %903 = vmatprep.subr.mxu0 0.0
    %904 = vmatpush2.msra.mxu0 0.0
    %905 = vmatprep.subr.mxu0 0.0
    %906 = vmatpush2.msra.mxu0 0.0
    %907 = vmatprep.mubr.f32.mxu0 0.0
    %908 = vmatmul.mubr.f32.gmra.mxu0 %v841
    %v909 = vpop.f32.mrf.mxu0
    %v910 = vadd.f32 0.0, %v909
    %v911 = vpop.f32.mrf.mxu0
    %912 = vdwg.mxu0
    %v914 = vrot.slane %v910, 6
    %v916 = vadd.f32 %v309, %v914
    %v917 = vxor.u32 %v916, 2147483648
    %v918 = vmul.f32 %v917, 1.442695
    %v919 = vpow.pop %v918
    %v920 = vadd.f32 %v919, 1.0
    %v921 = vrcp.pop %v920
    %v922 = vmul.f32 1.0, %v921
    %v923 = vtanh.pop %v916
    %v925 = vrot.slane %v831, 6
    %v927 = vmul.f32 %v922, %v925
    %929 = vrot.lane.b32.xlu0 %v923, 64
    %v930 = vpop.permute.xlu0 %929
    %v932 = vmul.f32 %v922, %v930
    %934 = vrot.lane.b32.xlu0 %v932, 32
    %v935 = vpop.permute.xlu0 %934
    %v937 = vadd.f32 %v927, %v935
    %v938 = vtanh.pop %v937
    %940 = vrot.lane.b32.xlu0 %v938, 64
    %v941 = vpop.permute.xlu0 %940
    %v943 = vmul.f32 %v922, %v941
    %v945 = vrot.slane %v943, 2
    %946 = vrot.lane.b32.xlu0 %v945, 32
    %v947 = vpop.permute.xlu0 %946
    %v948 = vsel %vm230, %v947, 0
    %950 = vmatprep.subr.mxu0 0.0
    %951 = vmatpush1.msra.mxu0 0.0
    %952 = vmatprep.subr.mxu0 0.0
    %953 = vmatpush1.msra.mxu0 0.0
    %954 = vmatprep.subr.mxu0 0.0
    %955 = vmatpush1.msra.mxu0 0.0
    %956 = vmatprep.subr.mxu0 0.0
    %957 = vmatpush1.msra.mxu0 0.0
    %958 = vmatprep.subr.mxu0 0.0
    %959 = vmatpush1.msra.mxu0 0.0
    %960 = vmatprep.subr.mxu0 0.0
    %961 = vmatpush1.msra.mxu0 0.0
    %962 = vmatprep.subr.mxu0 0.0
    %963 = vmatpush1.msra.mxu0 0.0
    %964 = vmatprep.subr.mxu0 0.0
    %965 = vmatpush1.msra.mxu0 0.0
    %966 = vmatprep.subr.mxu0 0.0
    %967 = vmatpush1.msra.mxu0 0.0
    %968 = vmatprep.subr.mxu0 0.0
    %969 = vmatpush1.msra.mxu0 0.0
    %970 = vmatprep.subr.mxu0 0.0
    %971 = vmatpush1.msra.mxu0 0.0
    %972 = vmatprep.subr.mxu0 0.0
    %973 = vmatpush1.msra.mxu0 0.0
    %974 = vmatprep.subr.mxu0 0.0
    %975 = vmatpush1.msra.mxu0 %v315
    %976 = vmatprep.subr.mxu0 0.0
    %977 = vmatpush1.msra.mxu0 %v314
    %978 = vmatprep.subr.mxu0 0.0
    %979 = vmatpush1.msra.mxu0 %v313
    %980 = vmatprep.subr.mxu0 0.0
    %981 = vmatpush1.msra.mxu0 %v312
    %982 = vmatprep.subr.mxu0 0.0
    %983 = vmatpush2.msra.mxu0 0.0
    %984 = vmatprep.subr.mxu0 0.0
    %985 = vmatpush2.msra.mxu0 0.0
    %986 = vmatprep.subr.mxu0 0.0
    %987 = vmatpush2.msra.mxu0 0.0
    %988 = vmatprep.subr.mxu0 0.0
    %989 = vmatpush2.msra.mxu0 0.0
    %990 = vmatprep.subr.mxu0 0.0
    %991 = vmatpush2.msra.mxu0 0.0
    %992 = vmatprep.subr.mxu0 0.0
    %993 = vmatpush2.msra.mxu0 0.0
    %994 = vmatprep.subr.mxu0 0.0
    %995 = vmatpush2.msra.mxu0 0.0
    %996 = vmatprep.subr.mxu0 0.0
    %997 = vmatpush2.msra.mxu0 0.0
    %998 = vmatprep.subr.mxu0 0.0
    %999 = vmatpush2.msra.mxu0 0.0
    %1000 = vmatprep.subr.mxu0 0.0
    %1001 = vmatpush2.msra.mxu0 0.0
    %1002 = vmatprep.subr.mxu0 0.0
    %1003 = vmatpush2.msra.mxu0 0.0
    %1004 = vmatprep.subr.mxu0 0.0
    %1005 = vmatpush2.msra.mxu0 0.0
    %1006 = vmatprep.subr.mxu0 0.0
    %1007 = vmatpush2.msra.mxu0 0.0
    %1008 = vmatprep.subr.mxu0 0.0
    %1009 = vmatpush2.msra.mxu0 0.0
    %1010 = vmatprep.subr.mxu0 0.0
    %1011 = vmatpush2.msra.mxu0 0.0
    %1012 = vmatprep.subr.mxu0 0.0
    %1013 = vmatpush2.msra.mxu0 0.0
    %1014 = vmatprep.mubr.f32.mxu0 0.0
    %1015 = vmatmul.mubr.f32.gmra.mxu0 %v948
    %v1016 = vpop.f32.mrf.mxu0
    %v1017 = vadd.f32 0.0, %v1016
    %v1018 = vpop.f32.mrf.mxu0
    %1019 = vdwg.mxu0
    %v1021 = vrot.slane %v1017, 4
    %v1023 = vadd.f32 %v309, %v1021
    %v1024 = vxor.u32 %v1023, 2147483648
    %v1025 = vmul.f32 %v1024, 1.442695
    %v1026 = vpow.pop %v1025
    %v1027 = vadd.f32 %v1026, 1.0
    %v1028 = vrcp.pop %v1027
    %v1029 = vmul.f32 1.0, %v1028
    %v1030 = vtanh.pop %v1023
    %v1032 = vrot.slane %v937, 6
    %v1034 = vmul.f32 %v1029, %v1032
    %1036 = vrot.lane.b32.xlu0 %v1030, 64
    %v1037 = vpop.permute.xlu0 %1036
    %v1039 = vmul.f32 %v1029, %v1037
    %1041 = vrot.lane.b32.xlu0 %v1039, 32
    %v1042 = vpop.permute.xlu0 %1041
    %v1044 = vadd.f32 %v1034, %v1042
    %v1045 = vtanh.pop %v1044
    %1047 = vrot.lane.b32.xlu0 %v1045, 64
    %v1048 = vpop.permute.xlu0 %1047
    %v1050 = vmul.f32 %v1029, %v1048
    %v1052 = vrot.slane %v1050, 4
    %1053 = vrot.lane.b32.xlu0 %v1052, 32
    %v1054 = vpop.permute.xlu0 %1053
    %v1055 = vsel %vm230, %v1054, 0
    %1057 = vmatprep.subr.mxu0 0.0
    %1058 = vmatpush1.msra.mxu0 0.0
    %1059 = vmatprep.subr.mxu0 0.0
    %1060 = vmatpush1.msra.mxu0 0.0
    %1061 = vmatprep.subr.mxu0 0.0
    %1062 = vmatpush1.msra.mxu0 0.0
    %1063 = vmatprep.subr.mxu0 0.0
    %1064 = vmatpush1.msra.mxu0 0.0
    %1065 = vmatprep.subr.mxu0 0.0
    %1066 = vmatpush1.msra.mxu0 0.0
    %1067 = vmatprep.subr.mxu0 0.0
    %1068 = vmatpush1.msra.mxu0 0.0
    %1069 = vmatprep.subr.mxu0 0.0
    %1070 = vmatpush1.msra.mxu0 0.0
    %1071 = vmatprep.subr.mxu0 0.0
    %1072 = vmatpush1.msra.mxu0 0.0
    %1073 = vmatprep.subr.mxu0 0.0
    %1074 = vmatpush1.msra.mxu0 0.0
    %1075 = vmatprep.subr.mxu0 0.0
    %1076 = vmatpush1.msra.mxu0 0.0
    %1077 = vmatprep.subr.mxu0 0.0
    %1078 = vmatpush1.msra.mxu0 0.0
    %1079 = vmatprep.subr.mxu0 0.0
    %1080 = vmatpush1.msra.mxu0 0.0
    %1081 = vmatprep.subr.mxu0 0.0
    %1082 = vmatpush1.msra.mxu0 %v315
    %1083 = vmatprep.subr.mxu0 0.0
    %1084 = vmatpush1.msra.mxu0 %v314
    %1085 = vmatprep.subr.mxu0 0.0
    %1086 = vmatpush1.msra.mxu0 %v313
    %1087 = vmatprep.subr.mxu0 0.0
    %1088 = vmatpush1.msra.mxu0 %v312
    %1089 = vmatprep.subr.mxu0 0.0
    %1090 = vmatpush2.msra.mxu0 0.0
    %1091 = vmatprep.subr.mxu0 0.0
    %1092 = vmatpush2.msra.mxu0 0.0
    %1093 = vmatprep.subr.mxu0 0.0
    %1094 = vmatpush2.msra.mxu0 0.0
    %1095 = vmatprep.subr.mxu0 0.0
    %1096 = vmatpush2.msra.mxu0 0.0
    %1097 = vmatprep.subr.mxu0 0.0
    %1098 = vmatpush2.msra.mxu0 0.0
    %1099 = vmatprep.subr.mxu0 0.0
    %1100 = vmatpush2.msra.mxu0 0.0
    %1101 = vmatprep.subr.mxu0 0.0
    %1102 = vmatpush2.msra.mxu0 0.0
    %1103 = vmatprep.subr.mxu0 0.0
    %1104 = vmatpush2.msra.mxu0 0.0
    %1105 = vmatprep.subr.mxu0 0.0
    %1106 = vmatpush2.msra.mxu0 0.0
    %1107 = vmatprep.subr.mxu0 0.0
    %1108 = vmatpush2.msra.mxu0 0.0
    %1109 = vmatprep.subr.mxu0 0.0
    %1110 = vmatpush2.msra.mxu0 0.0
    %1111 = vmatprep.subr.mxu0 0.0
    %1112 = vmatpush2.msra.mxu0 0.0
    %1113 = vmatprep.subr.mxu0 0.0
    %1114 = vmatpush2.msra.mxu0 0.0
    %1115 = vmatprep.subr.mxu0 0.0
    %1116 = vmatpush2.msra.mxu0 0.0
    %1117 = vmatprep.subr.mxu0 0.0
    %1118 = vmatpush2.msra.mxu0 0.0
    %1119 = vmatprep.subr.mxu0 0.0
    %1120 = vmatpush2.msra.mxu0 0.0
    %1121 = vmatprep.mubr.f32.mxu0 0.0
    %1122 = vmatmul.mubr.f32.gmra.mxu0 %v1055
    %v1123 = vpop.f32.mrf.mxu0
    %v1124 = vadd.f32 0.0, %v1123
    %v1125 = vpop.f32.mrf.mxu0
    %1126 = vdwg.mxu0
    %v1128 = vrot.slane %v1124, 2
    %v1130 = vadd.f32 %v309, %v1128
    %v1131 = vxor.u32 %v1130, 2147483648
    %v1132 = vmul.f32 %v1131, 1.442695
    %v1133 = vpow.pop %v1132
    %v1134 = vadd.f32 %v1133, 1.0
    %v1135 = vrcp.pop %v1134
    %v1136 = vmul.f32 1.0, %v1135
    %v1137 = vtanh.pop %v1130
    %v1139 = vrot.slane %v1044, 6
    %v1141 = vmul.f32 %v1136, %v1139
    %1143 = vrot.lane.b32.xlu0 %v1137, 64
    %v1144 = vpop.permute.xlu0 %1143
    %v1146 = vmul.f32 %v1136, %v1144
    %1148 = vrot.lane.b32.xlu0 %v1146, 32
    %v1149 = vpop.permute.xlu0 %1148
    %v1151 = vadd.f32 %v1141, %v1149
    %v1152 = vtanh.pop %v1151
    %1154 = vrot.lane.b32.xlu0 %v1152, 64
    %v1155 = vpop.permute.xlu0 %1154
    %v1157 = vmul.f32 %v1136, %v1155
    %v1158 = vld [vmem:[#allocation11] sm:$0xff]
    %v1159 = vld [vmem:[#allocation11 + $0x8] sm:$0xff]
    %v1160 = vld [vmem:[#allocation11 + $0x10] sm:$0xff]
    %v1161 = vld [vmem:[#allocation11 + $0x18] sm:$0xff]
    %v1162 = vld [vmem:[%s7] sm:$0x1]
    %v1164 = vlaneseq
    %v1165 = vshrl.u32 %v1164, 7
    %v1166 = vsub.s32 0, %v1165
    %v1167 = vrot.slane %v1162, %v1166
    %v1170 = vrot.slane %v1157, 6
    %1171 = vrot.lane.b32.xlu0 %v1170, 32
    %v1172 = vpop.permute.xlu0 %1171
    %v1173 = vsel %vm230, %v1172, 0
    %1175 = vmatprep.subr.mxu0 0.0
    %1176 = vmatpush1.msra.mxu0 0.0
    %1177 = vmatprep.subr.mxu0 0.0
    %1178 = vmatpush1.msra.mxu0 0.0
    %1179 = vmatprep.subr.mxu0 0.0
    %1180 = vmatpush1.msra.mxu0 0.0
    %1181 = vmatprep.subr.mxu0 0.0
    %1182 = vmatpush1.msra.mxu0 0.0
    %1183 = vmatprep.subr.mxu0 0.0
    %1184 = vmatpush1.msra.mxu0 0.0
    %1185 = vmatprep.subr.mxu0 0.0
    %1186 = vmatpush1.msra.mxu0 0.0
    %1187 = vmatprep.subr.mxu0 0.0
    %1188 = vmatpush1.msra.mxu0 0.0
    %1189 = vmatprep.subr.mxu0 0.0
    %1190 = vmatpush1.msra.mxu0 0.0
    %1191 = vmatprep.subr.mxu0 0.0
    %1192 = vmatpush1.msra.mxu0 0.0
    %1193 = vmatprep.subr.mxu0 0.0
    %1194 = vmatpush1.msra.mxu0 0.0
    %1195 = vmatprep.subr.mxu0 0.0
    %1196 = vmatpush1.msra.mxu0 0.0
    %1197 = vmatprep.subr.mxu0 0.0
    %1198 = vmatpush1.msra.mxu0 0.0
    %1199 = vmatprep.subr.mxu0 0.0
    %1200 = vmatpush1.msra.mxu0 %v1161
    %1201 = vmatprep.subr.mxu0 0.0
    %1202 = vmatpush1.msra.mxu0 %v1160
    %1203 = vmatprep.subr.mxu0 0.0
    %1204 = vmatpush1.msra.mxu0 %v1159
    %1205 = vmatprep.subr.mxu0 0.0
    %1206 = vmatpush1.msra.mxu0 %v1158
    %1207 = vmatprep.subr.mxu0 0.0
    %1208 = vmatpush2.msra.mxu0 0.0
    %1209 = vmatprep.subr.mxu0 0.0
    %1210 = vmatpush2.msra.mxu0 0.0
    %1211 = vmatprep.subr.mxu0 0.0
    %1212 = vmatpush2.msra.mxu0 0.0
    %1213 = vmatprep.subr.mxu0 0.0
    %1214 = vmatpush2.msra.mxu0 0.0
    %1215 = vmatprep.subr.mxu0 0.0
    %1216 = vmatpush2.msra.mxu0 0.0
    %1217 = vmatprep.subr.mxu0 0.0
    %1218 = vmatpush2.msra.mxu0 0.0
    %1219 = vmatprep.subr.mxu0 0.0
    %1220 = vmatpush2.msra.mxu0 0.0
    %1221 = vmatprep.subr.mxu0 0.0
    %1222 = vmatpush2.msra.mxu0 0.0
    %1223 = vmatprep.subr.mxu0 0.0
    %1224 = vmatpush2.msra.mxu0 0.0
    %1225 = vmatprep.subr.mxu0 0.0
    %1226 = vmatpush2.msra.mxu0 0.0
    %1227 = vmatprep.subr.mxu0 0.0
    %1228 = vmatpush2.msra.mxu0 0.0
    %1229 = vmatprep.subr.mxu0 0.0
    %1230 = vmatpush2.msra.mxu0 0.0
    %1231 = vmatprep.subr.mxu0 0.0
    %1232 = vmatpush2.msra.mxu0 0.0
    %1233 = vmatprep.subr.mxu0 0.0
    %1234 = vmatpush2.msra.mxu0 0.0
    %1235 = vmatprep.subr.mxu0 0.0
    %1236 = vmatpush2.msra.mxu0 0.0
    %1237 = vmatprep.subr.mxu0 0.0
    %1238 = vmatpush2.msra.mxu0 0.0
    %1239 = vmatprep.mubr.f32.mxu0 0.0
    %1240 = vmatmul.mubr.f32.gmra.mxu0 %v1173
    %v1241 = vpop.f32.mrf.mxu0
    %v1242 = vadd.f32 %v1167, %v1241
    %v1243 = vpop.f32.mrf.mxu0
    %1244 = vdwg.mxu0
    %v1245 = vtanh.pop %v1242
    %v1246 = vld [vmem:[#allocation13] sm:$0xff]
    %v1247 = vld [vmem:[#allocation13 + $0x8] sm:$0xff]
    %v1248 = vld [vmem:[#allocation13 + $0x10] sm:$0xff]
    %v1249 = vld [vmem:[#allocation13 + $0x18] sm:$0xff]
    %v1250 = vld [vmem:[%s9] sm:$0x1]
    %v1252 = vlaneseq
    %v1253 = vshrl.u32 %v1252, 7
    %v1254 = vsub.s32 0, %v1253
    %v1255 = vrot.slane %v1250, %v1254
    %v1258 = vsel %vm230, %v1245, 0
    %1260 = vmatprep.subr.mxu0 0.0
    %1261 = vmatpush1.msra.mxu0 0.0
    %1262 = vmatprep.subr.mxu0 0.0
    %1263 = vmatpush1.msra.mxu0 0.0
    %1264 = vmatprep.subr.mxu0 0.0
    %1265 = vmatpush1.msra.mxu0 0.0
    %1266 = vmatprep.subr.mxu0 0.0
    %1267 = vmatpush1.msra.mxu0 0.0
    %1268 = vmatprep.subr.mxu0 0.0
    %1269 = vmatpush1.msra.mxu0 0.0
    %1270 = vmatprep.subr.mxu0 0.0
    %1271 = vmatpush1.msra.mxu0 0.0
    %1272 = vmatprep.subr.mxu0 0.0
    %1273 = vmatpush1.msra.mxu0 0.0
    %1274 = vmatprep.subr.mxu0 0.0
    %1275 = vmatpush1.msra.mxu0 0.0
    %1276 = vmatprep.subr.mxu0 0.0
    %1277 = vmatpush1.msra.mxu0 0.0
    %1278 = vmatprep.subr.mxu0 0.0
    %1279 = vmatpush1.msra.mxu0 0.0
    %1280 = vmatprep.subr.mxu0 0.0
    %1281 = vmatpush1.msra.mxu0 0.0
    %1282 = vmatprep.subr.mxu0 0.0
    %1283 = vmatpush1.msra.mxu0 0.0
    %1284 = vmatprep.subr.mxu0 0.0
    %1285 = vmatpush1.msra.mxu0 %v1249
    %1286 = vmatprep.subr.mxu0 0.0
    %1287 = vmatpush1.msra.mxu0 %v1248
    %1288 = vmatprep.subr.mxu0 0.0
    %1289 = vmatpush1.msra.mxu0 %v1247
    %1290 = vmatprep.subr.mxu0 0.0
    %1291 = vmatpush1.msra.mxu0 %v1246
    %1292 = vmatprep.subr.mxu0 0.0
    %1293 = vmatpush2.msra.mxu0 0.0
    %1294 = vmatprep.subr.mxu0 0.0
    %1295 = vmatpush2.msra.mxu0 0.0
    %1296 = vmatprep.subr.mxu0 0.0
    %1297 = vmatpush2.msra.mxu0 0.0
    %1298 = vmatprep.subr.mxu0 0.0
    %1299 = vmatpush2.msra.mxu0 0.0
    %1300 = vmatprep.subr.mxu0 0.0
    %1301 = vmatpush2.msra.mxu0 0.0
    %1302 = vmatprep.subr.mxu0 0.0
    %1303 = vmatpush2.msra.mxu0 0.0
    %1304 = vmatprep.subr.mxu0 0.0
    %1305 = vmatpush2.msra.mxu0 0.0
    %1306 = vmatprep.subr.mxu0 0.0
    %1307 = vmatpush2.msra.mxu0 0.0
    %1308 = vmatprep.subr.mxu0 0.0
    %1309 = vmatpush2.msra.mxu0 0.0
    %1310 = vmatprep.subr.mxu0 0.0
    %1311 = vmatpush2.msra.mxu0 0.0
    %1312 = vmatprep.subr.mxu0 0.0
    %1313 = vmatpush2.msra.mxu0 0.0
    %1314 = vmatprep.subr.mxu0 0.0
    %1315 = vmatpush2.msra.mxu0 0.0
    %1316 = vmatprep.subr.mxu0 0.0
    %1317 = vmatpush2.msra.mxu0 0.0
    %1318 = vmatprep.subr.mxu0 0.0
    %1319 = vmatpush2.msra.mxu0 0.0
    %1320 = vmatprep.subr.mxu0 0.0
    %1321 = vmatpush2.msra.mxu0 0.0
    %1322 = vmatprep.subr.mxu0 0.0
    %1323 = vmatpush2.msra.mxu0 0.0
    %1324 = vmatprep.mubr.f32.mxu0 0.0
    %1325 = vmatmul.mubr.f32.gmra.mxu0 %v1258
    %v1326 = vpop.f32.mrf.mxu0
    %v1327 = vadd.f32 %v1255, %v1326
    %v1328 = vpop.f32.mrf.mxu0
    %1329 = vdwg.mxu0
    %1330 = vst [vmem:[#allocation14] sm:$0x3] %v1327
    // Predicated region
    $region70: #{tpu_custom_call.1} parent=1 // pred_check
      _
    $region71: #{tpu_custom_call.1} parent=1 // pred_check_branch
      %1332 = sbr.rel (0) target = $region73
    $region72: #{tpu_custom_call.1} parent=1 // pred_region
      %s1334 = ssub.s32 32, 32
      %1335 = vsyncadd [#allocation4], %s1334
      %s1337 = sshll.u32 [#allocation14], 4
      %s1338 = int_to_ptr.vmem [resolvable:$true] %s1337
      %1340 = dma.vmem_to_hbm [thread:$0]  %s1338, 32, %s10, [#allocation4]
    $region73: #{tpu_custom_call.1} parent=1 // pred_fallthru
      _
    // Predicated region
    $region74: #{tpu_custom_call.1} parent=1 // pred_check
      _
    $region75: #{tpu_custom_call.1} parent=1 // pred_check_branch
      %1342 = sbr.rel (0) target = $region77
    $region76: #{tpu_custom_call.1} parent=1 // pred_region
      %1343 = dma.done [#allocation4], 32
    $region77: #{tpu_custom_call.1} parent=1 // pred_fallthru
      _
    %1344 = vsyncpa [#allocation3], 1
    %1345 = vsyncpa [#allocation6], 1
    %1346 = vsyncpa [#allocation9], 1
    %1347 = vsyncpa [#allocation12], 1
    %1348 = vsyncpa [#allocation4], 1

</llo_original>
